<compile_context>
chip_gen: v6e
topology: v6e:2x2x1
jax: 0.10.0
libtpu: 0.0.40
codegen_flags: <defaults>
</compile_context>

<pallas_src>
import functools

import jax
import jax.numpy as jnp
from jax.experimental import pallas as pl
from jax.experimental.pallas import tpu as pltpu

EPS = 1e-5  # nn.InstanceNorm2d default


def _pick_channel_tile(cout):
    """Channel-tile size: a multiple of 8 that divides Cout, else Cout itself."""
    for cand in (32, 16, 8):
        if cout % cand == 0:
            return cand
    return cout  # "equal to full dim" is always a legal block size


def _fromrgb_kernel(xp_ref, w_ref, b_ref, mask_ref, o_ref, *,
                    taps, out_cols, n_valid):
    """Fused reflect-padded 3x3 conv + bias + InstanceNorm + ReLU.

    xp_ref:   (1, Cin_p, Lp)   flattened reflect-padded image (one batch item)
    w_ref:    (9, TCO, Cin_p)  per-tap conv weights (tap-major)
    b_ref:    (TCO, 1)         conv bias
    mask_ref: (1, L)           1.0 on valid output columns, 0.0 on pad columns
    o_ref:    (1, TCO, L)      normalized + ReLU output, flattened (H, Wp)
    """
    tco = w_ref.shape[1]
    mask = mask_ref[...]                                    # (1, L)

    # 3x3 conv as 9 shifted VMEM slices, accumulated in f32 on the MXU.
    acc = jnp.zeros((tco, out_cols), jnp.float32)
    for t, off in enumerate(taps):                          # 9 static taps
        patch = xp_ref[0, :, off:off + out_cols]            # (Cin_p, L)
        acc = acc + jnp.dot(w_ref[t], patch,
                            preferred_element_type=jnp.float32)
    acc = acc + b_ref[...]                                  # per-channel bias

    # InstanceNorm2d (affine=False, biased variance) over the valid columns.
    inv_n = 1.0 / float(n_valid)
    mean = jnp.sum(acc * mask, axis=-1, keepdims=True) * inv_n
    diff = acc - mean
    var = jnp.sum(diff * diff * mask, axis=-1, keepdims=True) * inv_n
    y = diff * jax.lax.rsqrt(var + EPS)

    # ReLU; also zero the (unused) pad columns so the padded output is clean.
    y = jnp.maximum(y, 0.0) * mask
    o_ref[0] = y


def from_rgb_3(params, x):
    """Forward pass of fromRGB_3 for NCHW float32 input x = (N, 3, H, W)."""
    w, b = params["w"], params["b"]            # (Cout, Cin, 3, 3), (Cout,)
    n, cin, h, wd = x.shape
    cout = w.shape[0]
    assert w.shape[1] == cin and w.shape[2:] == (3, 3)

    hp, wp = h + 2, wd + 2                     # reflect-padded spatial dims
    out_cols = h * wp                          # flattened (H, Wp) output columns
    cin_p = max(8, ((cin + 7) // 8) * 8)       # sublane-friendly channel pad
    lp = (h + 3) * wp                          # +1 zero row keeps tap slices in-bounds

    # ReflectionPad2d(1), one extra zero row (never read by valid outputs),
    # zero-pad channels, then flatten spatial -> (N, Cin_p, Hp'*Wp).
    xp = jnp.pad(x, ((0, 0), (0, 0), (1, 1), (1, 1)), mode="reflect")
    xp = jnp.pad(xp, ((0, 0), (0, cin_p - cin), (0, 1), (0, 0)))
    xp_flat = xp.reshape(n, cin_p, lp)

    # Tap-major weights: w9[t] = W[:, :, ky, kx] with t = 3*ky + kx.
    w9 = jnp.pad(w, ((0, 0), (0, cin_p - cin), (0, 0), (0, 0)))
    w9 = w9.transpose(2, 3, 0, 1).reshape(9, cout, cin_p).astype(jnp.float32)
    b2 = b.reshape(cout, 1).astype(jnp.float32)

    # Valid-column mask over the flattened (H, Wp) layout (column x < W).
    mask = (jnp.arange(out_cols, dtype=jnp.int32) % wp) < wd
    mask = mask.astype(jnp.float32).reshape(1, out_cols)

    taps = tuple(ky * wp + kx for ky in range(3) for kx in range(3))
    tco = _pick_channel_tile(cout)
    grid = (n, cout // tco)

    # Explicit VMEM budget: (double-buffered) blocks + slack, capped for v7x.
    blk_bytes = 4 * (cin_p * lp + 9 * tco * cin_p + tco
                     + out_cols + tco * out_cols)
    vmem_limit = int(min(max(4 * blk_bytes + (1 << 21), 4 << 20), 48 << 20))

    kernel = functools.partial(_fromrgb_kernel, taps=taps,
                               out_cols=out_cols, n_valid=h * wd)
    out_flat = pl.pallas_call(
        kernel,
        out_shape=jax.ShapeDtypeStruct((n, cout, out_cols), jnp.float32),
        grid=grid,
        in_specs=[
            pl.BlockSpec((1, cin_p, lp), lambda i, c: (i, 0, 0)),
            pl.BlockSpec((9, tco, cin_p), lambda i, c: (0, c, 0)),
            pl.BlockSpec((tco, 1), lambda i, c: (c, 0)),
            pl.BlockSpec((1, out_cols), lambda i, c: (0, 0)),
        ],
        out_specs=pl.BlockSpec((1, tco, out_cols), lambda i, c: (i, c, 0)),
        compiler_params=pltpu.CompilerParams(
            dimension_semantics=("parallel", "parallel"),
            vmem_limit_bytes=vmem_limit,
        ),
        cost_estimate=pl.CostEstimate(
            flops=2 * n * cout * cin * 9 * h * wd,
            transcendentals=n * cout,
            bytes_accessed=4 * (n * cin_p * lp + 9 * cout * cin_p + cout
                                + out_cols + n * cout * out_cols),
        ),
    )(xp_flat, w9, b2, mask)

    # Drop the Wp-W pad columns: (N, Cout, H*Wp) -> (N, Cout, H, W).
    return out_flat.reshape(n, cout, h, wp)[:, :, :, :wd]


# --------------------------- parameters & reference -------------------------

def init_params(key, out_c, in_c=3):
    kw, kb = jax.random.split(key)
    fan_in, fan_out = in_c * 9, out_c * 9
    std = (2.0 / (fan_in + fan_out)) ** 0.5            # nn.init.xavier_normal_
    w = std * jax.random.normal(kw, (out_c, in_c, 3, 3), jnp.float32)
    bound = 1.0 / (fan_in ** 0.5)                      # Conv2d default bias init
    b = jax.random.uniform(kb, (out_c,), jnp.float32, -bound, bound)
    return {"w": w, "b": b}


def _reference(params, x):
    """Pure-JAX reference of the same forward pass (for a correctness check)."""
    xp = jnp.pad(x, ((0, 0), (0, 0), (1, 1), (1, 1)), mode="reflect")
    y = jax.lax.conv_general_dilated(
        xp, params["w"], window_strides=(1, 1), padding="VALID",
        dimension_numbers=("NCHW", "OIHW", "NCHW"))
    y = y + params["b"].reshape(1, -1, 1, 1)
    mean = jnp.mean(y, axis=(2, 3), keepdims=True)
    var = jnp.mean(jnp.square(y - mean), axis=(2, 3), keepdims=True)
    y = (y - mean) * jax.lax.rsqrt(var + EPS)
    return jnp.maximum(y, 0.0)


if __name__ == "__main__":
    key = jax.random.PRNGKey(0)
    kp, kx = jax.random.split(key)

    N, C, H, W = 2, 3, 16, 16
    out_c = 8
    params = init_params(kp, out_c, C)
    x = jax.random.normal(kx, (N, C, H, W), jnp.float32)

    fwd = jax.jit(functools.partial(from_rgb_3, params))
    out = fwd(x)
    jax.block_until_ready(out)

    assert out.shape == (N, out_c, H, W)
    assert bool(jnp.all(jnp.isfinite(out)))

    ref = _reference(params, x)
    err = float(jnp.max(jnp.abs(out - ref)))
    assert err < 5e-2, f"mismatch vs reference: max abs err {err}"
    print("KERNEL_OK")
</pallas_src>

<mosaic_0001>
module attributes {stable_mosaic.version = 11 : i64} {
  func.func @_fromrgb_kernel(%arg0: i32, %arg1: i32, %arg2: memref<1x8x342xf32, #tpu.memory_space<vmem>>, %arg3: memref<9x8x8xf32, #tpu.memory_space<vmem>>, %arg4: memref<8x1xf32, #tpu.memory_space<vmem>>, %arg5: memref<1x288xf32, #tpu.memory_space<vmem>>, %arg6: memref<1x8x288xf32, #tpu.memory_space<vmem>>) attributes {dimension_semantics = [#tpu.dimension_semantics<parallel>, #tpu.dimension_semantics<parallel>], iteration_bounds = array<i64: 2, 1>, scalar_prefetch = 0 : i64, scratch_operands = 0 : i64, tpu.core_type = #tpu.core_type<tc>, window_params = [{transform_indices = @transform_0, window_bounds = array<i64: 1, 8, 342>}, {transform_indices = @transform_1, window_bounds = array<i64: 9, 8, 8>}, {transform_indices = @transform_2, window_bounds = array<i64: 8, 1>}, {pipeline_mode = #tpu.pipeline_mode<synchronous>, transform_indices = @transform_3, window_bounds = array<i64: 1, 288>}, {transform_indices = @transform_4, window_bounds = array<i64: 1, 8, 288>}]} {
    %c0 = arith.constant 0 : index
    %c0_0 = arith.constant 0 : index
    %0 = vector.load %arg5[%c0, %c0_0] : memref<1x288xf32, #tpu.memory_space<vmem>>, vector<1x288xf32>
    %cst = arith.constant 0.000000e+00 : f32
    %1 = vector.broadcast %cst : f32 to vector<8x288xf32>
    %c0_1 = arith.constant 0 : index
    %c0_2 = arith.constant 0 : index
    %c0_3 = arith.constant 0 : index
    %2 = vector.load %arg2[%c0_1, %c0_2, %c0_3] : memref<1x8x342xf32, #tpu.memory_space<vmem>>, vector<1x8x288xf32>
    %3 = vector.shape_cast %2 : vector<1x8x288xf32> to vector<8x288xf32>
    %c0_4 = arith.constant 0 : index
    %c0_5 = arith.constant 0 : index
    %c0_6 = arith.constant 0 : index
    %4 = vector.load %arg3[%c0_4, %c0_5, %c0_6] : memref<9x8x8xf32, #tpu.memory_space<vmem>>, vector<1x8x8xf32>
    %5 = vector.shape_cast %4 : vector<1x8x8xf32> to vector<8x8xf32>
    %cst_7 = arith.constant dense<0.000000e+00> : vector<8x288xf32>
    %6 = tpu.matmul %5, %3, %cst_7 {dimension_numbers = #tpu.dot_dimension_numbers<[1], [0], [0], [1], [0, 0, 1, 1], [], []>} : vector<8x8xf32>, vector<8x288xf32>, vector<8x288xf32> -> vector<8x288xf32>
    %7 = arith.addf %1, %6 : vector<8x288xf32>
    %c0_8 = arith.constant 0 : index
    %c0_9 = arith.constant 0 : index
    %c1 = arith.constant 1 : index
    %8 = vector.load %arg2[%c0_8, %c0_9, %c1] : memref<1x8x342xf32, #tpu.memory_space<vmem>>, vector<1x8x288xf32>
    %9 = vector.shape_cast %8 : vector<1x8x288xf32> to vector<8x288xf32>
    %c1_10 = arith.constant 1 : index
    %c0_11 = arith.constant 0 : index
    %c0_12 = arith.constant 0 : index
    %10 = vector.load %arg3[%c1_10, %c0_11, %c0_12] : memref<9x8x8xf32, #tpu.memory_space<vmem>>, vector<1x8x8xf32>
    %11 = vector.shape_cast %10 : vector<1x8x8xf32> to vector<8x8xf32>
    %cst_13 = arith.constant dense<0.000000e+00> : vector<8x288xf32>
    %12 = tpu.matmul %11, %9, %cst_13 {dimension_numbers = #tpu.dot_dimension_numbers<[1], [0], [0], [1], [0, 0, 1, 1], [], []>} : vector<8x8xf32>, vector<8x288xf32>, vector<8x288xf32> -> vector<8x288xf32>
    %13 = arith.addf %7, %12 : vector<8x288xf32>
    %c0_14 = arith.constant 0 : index
    %c0_15 = arith.constant 0 : index
    %c2 = arith.constant 2 : index
    %14 = vector.load %arg2[%c0_14, %c0_15, %c2] : memref<1x8x342xf32, #tpu.memory_space<vmem>>, vector<1x8x288xf32>
    %15 = vector.shape_cast %14 : vector<1x8x288xf32> to vector<8x288xf32>
    %c2_16 = arith.constant 2 : index
    %c0_17 = arith.constant 0 : index
    %c0_18 = arith.constant 0 : index
    %16 = vector.load %arg3[%c2_16, %c0_17, %c0_18] : memref<9x8x8xf32, #tpu.memory_space<vmem>>, vector<1x8x8xf32>
    %17 = vector.shape_cast %16 : vector<1x8x8xf32> to vector<8x8xf32>
    %cst_19 = arith.constant dense<0.000000e+00> : vector<8x288xf32>
    %18 = tpu.matmul %17, %15, %cst_19 {dimension_numbers = #tpu.dot_dimension_numbers<[1], [0], [0], [1], [0, 0, 1, 1], [], []>} : vector<8x8xf32>, vector<8x288xf32>, vector<8x288xf32> -> vector<8x288xf32>
    %19 = arith.addf %13, %18 : vector<8x288xf32>
    %c0_20 = arith.constant 0 : index
    %c0_21 = arith.constant 0 : index
    %c18 = arith.constant 18 : index
    %20 = vector.load %arg2[%c0_20, %c0_21, %c18] : memref<1x8x342xf32, #tpu.memory_space<vmem>>, vector<1x8x288xf32>
    %21 = vector.shape_cast %20 : vector<1x8x288xf32> to vector<8x288xf32>
    %c3 = arith.constant 3 : index
    %c0_22 = arith.constant 0 : index
    %c0_23 = arith.constant 0 : index
    %22 = vector.load %arg3[%c3, %c0_22, %c0_23] : memref<9x8x8xf32, #tpu.memory_space<vmem>>, vector<1x8x8xf32>
    %23 = vector.shape_cast %22 : vector<1x8x8xf32> to vector<8x8xf32>
    %cst_24 = arith.constant dense<0.000000e+00> : vector<8x288xf32>
    %24 = tpu.matmul %23, %21, %cst_24 {dimension_numbers = #tpu.dot_dimension_numbers<[1], [0], [0], [1], [0, 0, 1, 1], [], []>} : vector<8x8xf32>, vector<8x288xf32>, vector<8x288xf32> -> vector<8x288xf32>
    %25 = arith.addf %19, %24 : vector<8x288xf32>
    %c0_25 = arith.constant 0 : index
    %c0_26 = arith.constant 0 : index
    %c19 = arith.constant 19 : index
    %26 = vector.load %arg2[%c0_25, %c0_26, %c19] : memref<1x8x342xf32, #tpu.memory_space<vmem>>, vector<1x8x288xf32>
    %27 = vector.shape_cast %26 : vector<1x8x288xf32> to vector<8x288xf32>
    %c4 = arith.constant 4 : index
    %c0_27 = arith.constant 0 : index
    %c0_28 = arith.constant 0 : index
    %28 = vector.load %arg3[%c4, %c0_27, %c0_28] : memref<9x8x8xf32, #tpu.memory_space<vmem>>, vector<1x8x8xf32>
    %29 = vector.shape_cast %28 : vector<1x8x8xf32> to vector<8x8xf32>
    %cst_29 = arith.constant dense<0.000000e+00> : vector<8x288xf32>
    %30 = tpu.matmul %29, %27, %cst_29 {dimension_numbers = #tpu.dot_dimension_numbers<[1], [0], [0], [1], [0, 0, 1, 1], [], []>} : vector<8x8xf32>, vector<8x288xf32>, vector<8x288xf32> -> vector<8x288xf32>
    %31 = arith.addf %25, %30 : vector<8x288xf32>
    %c0_30 = arith.constant 0 : index
    %c0_31 = arith.constant 0 : index
    %c20 = arith.constant 20 : index
    %32 = vector.load %arg2[%c0_30, %c0_31, %c20] : memref<1x8x342xf32, #tpu.memory_space<vmem>>, vector<1x8x288xf32>
    %33 = vector.shape_cast %32 : vector<1x8x288xf32> to vector<8x288xf32>
    %c5 = arith.constant 5 : index
    %c0_32 = arith.constant 0 : index
    %c0_33 = arith.constant 0 : index
    %34 = vector.load %arg3[%c5, %c0_32, %c0_33] : memref<9x8x8xf32, #tpu.memory_space<vmem>>, vector<1x8x8xf32>
    %35 = vector.shape_cast %34 : vector<1x8x8xf32> to vector<8x8xf32>
    %cst_34 = arith.constant dense<0.000000e+00> : vector<8x288xf32>
    %36 = tpu.matmul %35, %33, %cst_34 {dimension_numbers = #tpu.dot_dimension_numbers<[1], [0], [0], [1], [0, 0, 1, 1], [], []>} : vector<8x8xf32>, vector<8x288xf32>, vector<8x288xf32> -> vector<8x288xf32>
    %37 = arith.addf %31, %36 : vector<8x288xf32>
    %c0_35 = arith.constant 0 : index
    %c0_36 = arith.constant 0 : index
    %c36 = arith.constant 36 : index
    %38 = vector.load %arg2[%c0_35, %c0_36, %c36] : memref<1x8x342xf32, #tpu.memory_space<vmem>>, vector<1x8x288xf32>
    %39 = vector.shape_cast %38 : vector<1x8x288xf32> to vector<8x288xf32>
    %c6 = arith.constant 6 : index
    %c0_37 = arith.constant 0 : index
    %c0_38 = arith.constant 0 : index
    %40 = vector.load %arg3[%c6, %c0_37, %c0_38] : memref<9x8x8xf32, #tpu.memory_space<vmem>>, vector<1x8x8xf32>
    %41 = vector.shape_cast %40 : vector<1x8x8xf32> to vector<8x8xf32>
    %cst_39 = arith.constant dense<0.000000e+00> : vector<8x288xf32>
    %42 = tpu.matmul %41, %39, %cst_39 {dimension_numbers = #tpu.dot_dimension_numbers<[1], [0], [0], [1], [0, 0, 1, 1], [], []>} : vector<8x8xf32>, vector<8x288xf32>, vector<8x288xf32> -> vector<8x288xf32>
    %43 = arith.addf %37, %42 : vector<8x288xf32>
    %c0_40 = arith.constant 0 : index
    %c0_41 = arith.constant 0 : index
    %c37 = arith.constant 37 : index
    %44 = vector.load %arg2[%c0_40, %c0_41, %c37] : memref<1x8x342xf32, #tpu.memory_space<vmem>>, vector<1x8x288xf32>
    %45 = vector.shape_cast %44 : vector<1x8x288xf32> to vector<8x288xf32>
    %c7 = arith.constant 7 : index
    %c0_42 = arith.constant 0 : index
    %c0_43 = arith.constant 0 : index
    %46 = vector.load %arg3[%c7, %c0_42, %c0_43] : memref<9x8x8xf32, #tpu.memory_space<vmem>>, vector<1x8x8xf32>
    %47 = vector.shape_cast %46 : vector<1x8x8xf32> to vector<8x8xf32>
    %cst_44 = arith.constant dense<0.000000e+00> : vector<8x288xf32>
    %48 = tpu.matmul %47, %45, %cst_44 {dimension_numbers = #tpu.dot_dimension_numbers<[1], [0], [0], [1], [0, 0, 1, 1], [], []>} : vector<8x8xf32>, vector<8x288xf32>, vector<8x288xf32> -> vector<8x288xf32>
    %49 = arith.addf %43, %48 : vector<8x288xf32>
    %c0_45 = arith.constant 0 : index
    %c0_46 = arith.constant 0 : index
    %c38 = arith.constant 38 : index
    %50 = vector.load %arg2[%c0_45, %c0_46, %c38] : memref<1x8x342xf32, #tpu.memory_space<vmem>>, vector<1x8x288xf32>
    %51 = vector.shape_cast %50 : vector<1x8x288xf32> to vector<8x288xf32>
    %c8 = arith.constant 8 : index
    %c0_47 = arith.constant 0 : index
    %c0_48 = arith.constant 0 : index
    %52 = vector.load %arg3[%c8, %c0_47, %c0_48] : memref<9x8x8xf32, #tpu.memory_space<vmem>>, vector<1x8x8xf32>
    %53 = vector.shape_cast %52 : vector<1x8x8xf32> to vector<8x8xf32>
    %cst_49 = arith.constant dense<0.000000e+00> : vector<8x288xf32>
    %54 = tpu.matmul %53, %51, %cst_49 {dimension_numbers = #tpu.dot_dimension_numbers<[1], [0], [0], [1], [0, 0, 1, 1], [], []>} : vector<8x8xf32>, vector<8x288xf32>, vector<8x288xf32> -> vector<8x288xf32>
    %55 = arith.addf %49, %54 : vector<8x288xf32>
    %c0_50 = arith.constant 0 : index
    %c0_51 = arith.constant 0 : index
    %56 = vector.load %arg4[%c0_50, %c0_51] : memref<8x1xf32, #tpu.memory_space<vmem>>, vector<8x1xf32>
    %57 = vector.broadcast %56 : vector<8x1xf32> to vector<8x288xf32>
    %58 = arith.addf %55, %57 : vector<8x288xf32>
    %59 = vector.broadcast %0 : vector<1x288xf32> to vector<8x288xf32>
    %60 = arith.mulf %58, %59 : vector<8x288xf32>
    %cst_52 = arith.constant dense<0.000000e+00> : vector<8xf32>
    %61 = vector.multi_reduction <add>, %60, %cst_52 [1] : vector<8x288xf32> to vector<8xf32>
    %62 = vector.shape_cast %61 : vector<8xf32> to vector<8x1xf32>
    %cst_53 = arith.constant 3.906250e-03 : f32
    %63 = vector.broadcast %cst_53 : f32 to vector<8x1xf32>
    %64 = arith.mulf %62, %63 : vector<8x1xf32>
    %65 = vector.broadcast %64 : vector<8x1xf32> to vector<8x288xf32>
    %66 = arith.subf %58, %65 : vector<8x288xf32>
    %67 = arith.mulf %66, %66 : vector<8x288xf32>
    %68 = vector.broadcast %0 : vector<1x288xf32> to vector<8x288xf32>
    %69 = arith.mulf %67, %68 : vector<8x288xf32>
    %cst_54 = arith.constant dense<0.000000e+00> : vector<8xf32>
    %70 = vector.multi_reduction <add>, %69, %cst_54 [1] : vector<8x288xf32> to vector<8xf32>
    %71 = vector.shape_cast %70 : vector<8xf32> to vector<8x1xf32>
    %cst_55 = arith.constant 3.906250e-03 : f32
    %72 = vector.broadcast %cst_55 : f32 to vector<8x1xf32>
    %73 = arith.mulf %71, %72 : vector<8x1xf32>
    %cst_56 = arith.constant 9.99999974E-6 : f32
    %74 = vector.broadcast %cst_56 : f32 to vector<8x1xf32>
    %75 = arith.addf %73, %74 : vector<8x1xf32>
    %76 = math.rsqrt %75 : vector<8x1xf32>
    %77 = vector.broadcast %76 : vector<8x1xf32> to vector<8x288xf32>
    %78 = arith.mulf %66, %77 : vector<8x288xf32>
    %cst_57 = arith.constant 0.000000e+00 : f32
    %79 = vector.broadcast %cst_57 : f32 to vector<8x288xf32>
    %80 = arith.maximumf %78, %79 : vector<8x288xf32>
    %81 = vector.broadcast %0 : vector<1x288xf32> to vector<8x288xf32>
    %82 = arith.mulf %80, %81 : vector<8x288xf32>
    %c0_58 = arith.constant 0 : index
    %c0_59 = arith.constant 0 : index
    %c0_60 = arith.constant 0 : index
    %83 = vector.load %arg6[%c0_58, %c0_59, %c0_60] : memref<1x8x288xf32, #tpu.memory_space<vmem>>, vector<1x8x288xf32>
    %84 = vector.shape_cast %83 : vector<1x8x288xf32> to vector<8x288xf32>
    %85 = vector.shape_cast %82 : vector<8x288xf32> to vector<1x8x288xf32>
    tpu.vector_store %arg6[%c0_58, %c0_59, %c0_60], %85 {strides = array<i32>} : memref<1x8x288xf32, #tpu.memory_space<vmem>>, vector<1x8x288xf32>,
    return
  }
  func.func @transform_0(%arg0: i32, %arg1: i32) -> (i32, i32, i32) {
    %c0_i32 = arith.constant 0 : i32
    %c0_i32_0 = arith.constant 0 : i32
    %c0_i32_1 = arith.constant 0 : i32
    return %arg0, %c0_i32, %c0_i32_0 : i32, i32, i32
  }
  func.func @transform_1(%arg0: i32, %arg1: i32) -> (i32, i32, i32) {
    %c0_i32 = arith.constant 0 : i32
    %c0_i32_0 = arith.constant 0 : i32
    %c0_i32_1 = arith.constant 0 : i32
    return %c0_i32, %arg1, %c0_i32_0 : i32, i32, i32
  }
  func.func @transform_2(%arg0: i32, %arg1: i32) -> (i32, i32) {
    %c0_i32 = arith.constant 0 : i32
    %c0_i32_0 = arith.constant 0 : i32
    return %arg1, %c0_i32 : i32, i32
  }
  func.func @transform_3(%arg0: i32, %arg1: i32) -> (i32, i32) {
    %c0_i32 = arith.constant 0 : i32
    %c0_i32_0 = arith.constant 0 : i32
    %c0_i32_1 = arith.constant 0 : i32
    return %c0_i32, %c0_i32_0 : i32, i32
  }
  func.func @transform_4(%arg0: i32, %arg1: i32) -> (i32, i32, i32) {
    %c0_i32 = arith.constant 0 : i32
    %c0_i32_0 = arith.constant 0 : i32
    return %arg0, %arg1, %c0_i32 : i32, i32, i32
  }
}

</mosaic_0001>

<llo_original>
// kernel: from_rgb_3.1
$region0: #{from_rgb_3.1}
  #allocation0 [shape = 'u32[]', space=smem, size = 0x4, offset = 0x4, fixed_abs, tag = 'smem constant byte address 0x4 - core index']
  #allocation1 [shape = 'u32[144,128]{1,0:T(1,128)}', space=vmem, size = 0x12000, scoped, tag = 'internal scratch']
  %s0 = inlined_call_operand.vmem [shape: f32[2,8,342], index: 0, kind: input, shape index: {}]
  %s1 = inlined_call_operand.vmem [shape: f32[9,8,8], index: 1, kind: input, shape index: {}]
  %s2 = inlined_call_operand.vmem [shape: f32[8,1], index: 2, kind: input, shape index: {}]
  %s3 = inlined_call_operand.vmem [shape: f32[1,288], index: 3, kind: input, shape index: {}]
  %s4 = inlined_call_operand.vmem [shape: f32[2,8,288], index: 4, kind: output, shape index: {}]
  %s5 = sld [smem:[#allocation0]]
  $region49: #{from_rgb_3.1} parent=0
    _
  %s7 = ssub.s32 1, %s5
  %s8 = scalar_select 0, %s7, %s5
  loop: start=0, step=1, limit=4
  $region2: #{from_rgb_3.1} parent=0 // loop_pre_header
    _
  $region3: #{from_rgb_3.1} parent=0 // loop_header
    %s10 = sphi 0, %s14
    %p11 = scmp.ge.s32.totalorder %s10, 4
    %s17 = sphi 0, %s29
    %s18 = sphi 0, %s25
    %s19 = sphi 0, %s17
    %s20 = sphi 0, %s18
    %s21 = sphi 0, %s19
    %s22 = sphi 0, %s20
    %s32 = sphi 0, %s34
    %s35 = sphi 0, %s32
    %s36 = sphi 0, %s35
    %s52 = sphi 0, %s36
    %s58 = sphi 0, %s60
    %s61 = sphi 0, %s58
    %s62 = sphi 0, %s61
    %s78 = sphi 0, %s62
    %s84 = sphi 0, %s86
    %s87 = sphi 0, %s84
    %s88 = sphi 0, %s87
    %s104 = sphi 0, %s88
    %s108 = sphi 0, %s108
    %s110 = sphi 0, %s108
    %s111 = sphi 0, %s110
    %s125 = sphi 0, %s111
    %s133 = sphi 0, %s135
    %s136 = sphi 0, %s133
    %s137 = sphi 0, %s136
    %s153 = sphi 0, %s137
  $region4: #{from_rgb_3.1} parent=0 // loop_header_branch
    %13 = sbr.rel (%p11) target = $region8
  $region5: #{from_rgb_3.1} parent=0 // loop_body
    %s15 = ssub.s32 %s10, 1
    %s16 = ssub.s32 %s10, 2
    %s23 = sadd.s32 1, %s18
    %p24 = scmp.ge.s32.totalorder %s23, 1
    %s25 = scalar_select %p24, 0, %s23
    %s26 = sadd.s32 1, %s17
    %s27 = scalar_select %p24, %s26, %s17
    %p28 = scmp.ge.s32.totalorder %s27, 2
    %s29 = scalar_select %p28, 0, %s27
    %s30 = ssub.s32 %s17, %s29
    %p31 = scmp.eq.s32.totalorder %s30, 0
    %s33 = sadd.s32 %s32, 1
    %s34 = scalar_select %p31, %s32, %s33
    %p37 = pneg %p31
    %p38 = scmp.eq.s32.totalorder %s10, 1
    %p39 = por %p37, %p38
    %p40 = scmp.ne.s32.totalorder %s32, %s35
    %p41 = scmp.eq.s32.totalorder %s10, 0
    %p42 = por %p40, %p41
    %p43 = scmp.ne.s32.totalorder %s32, %s35
    %p44 = scmp.eq.s32.totalorder %s15, 1
    %p45 = por %p43, %p44
    %p46 = scmp.ne.s32.totalorder %s35, %s36
    %p47 = scmp.eq.s32.totalorder %s15, 0
    %p48 = por %p46, %p47
    %p49 = scmp.ne.s32.totalorder %s35, %s36
    %p50 = scmp.eq.s32.totalorder %s16, 1
    %p51 = por %p49, %p50
    %p53 = scmp.ne.s32.totalorder %s36, %s52
    %p54 = scmp.eq.s32.totalorder %s16, 0
    %p55 = por %p53, %p54
    %s56 = ssub.s32 %s18, %s25
    %p57 = scmp.eq.s32.totalorder %s56, 0
    %s59 = sadd.s32 %s58, 1
    %s60 = scalar_select %p57, %s58, %s59
    %p63 = pneg %p57
    %p64 = scmp.eq.s32.totalorder %s10, 1
    %p65 = por %p63, %p64
    %p66 = scmp.ne.s32.totalorder %s58, %s61
    %p67 = scmp.eq.s32.totalorder %s10, 0
    %p68 = por %p66, %p67
    %p69 = scmp.ne.s32.totalorder %s58, %s61
    %p70 = scmp.eq.s32.totalorder %s15, 1
    %p71 = por %p69, %p70
    %p72 = scmp.ne.s32.totalorder %s61, %s62
    %p73 = scmp.eq.s32.totalorder %s15, 0
    %p74 = por %p72, %p73
    %p75 = scmp.ne.s32.totalorder %s61, %s62
    %p76 = scmp.eq.s32.totalorder %s16, 1
    %p77 = por %p75, %p76
    %p79 = scmp.ne.s32.totalorder %s62, %s78
    %p80 = scmp.eq.s32.totalorder %s16, 0
    %p81 = por %p79, %p80
    %s82 = ssub.s32 %s18, %s25
    %p83 = scmp.eq.s32.totalorder %s82, 0
    %s85 = sadd.s32 %s84, 1
    %s86 = scalar_select %p83, %s84, %s85
    %p89 = pneg %p83
    %p90 = scmp.eq.s32.totalorder %s10, 1
    %p91 = por %p89, %p90
    %p92 = scmp.ne.s32.totalorder %s84, %s87
    %p93 = scmp.eq.s32.totalorder %s10, 0
    %p94 = por %p92, %p93
    %p95 = scmp.ne.s32.totalorder %s84, %s87
    %p96 = scmp.eq.s32.totalorder %s15, 1
    %p97 = por %p95, %p96
    %p98 = scmp.ne.s32.totalorder %s87, %s88
    %p99 = scmp.eq.s32.totalorder %s15, 0
    %p100 = por %p98, %p99
    %p101 = scmp.ne.s32.totalorder %s87, %s88
    %p102 = scmp.eq.s32.totalorder %s16, 1
    %p103 = por %p101, %p102
    %p105 = scmp.ne.s32.totalorder %s88, %s104
    %p106 = scmp.eq.s32.totalorder %s16, 0
    %p107 = por %p105, %p106
    %s109 = sadd.s32 %s108, 1
    %p112 = scmp.eq.s32.totalorder %s10, 1
    %p113 = scmp.ne.s32.totalorder %s108, %s110
    %p114 = scmp.eq.s32.totalorder %s10, 0
    %p115 = por %p113, %p114
    %p116 = scmp.ne.s32.totalorder %s108, %s110
    %p117 = scmp.eq.s32.totalorder %s15, 1
    %p118 = por %p116, %p117
    %p119 = scmp.ne.s32.totalorder %s110, %s111
    %p120 = scmp.eq.s32.totalorder %s15, 0
    %p121 = por %p119, %p120
    %p122 = scmp.ne.s32.totalorder %s110, %s111
    %p123 = scmp.eq.s32.totalorder %s16, 1
    %p124 = por %p122, %p123
    %p126 = scmp.ne.s32.totalorder %s111, %s125
    %p127 = scmp.eq.s32.totalorder %s16, 0
    %p128 = por %p126, %p127
    %s129 = ssub.s32 %s17, %s29
    %s130 = ssub.s32 %s18, %s25
    %s131 = sor.u32 %s129, %s130
    %p132 = scmp.eq.s32.totalorder %s131, 0
    %s134 = sadd.s32 %s133, 1
    %s135 = scalar_select %p132, %s133, %s134
    %p138 = pneg %p132
    %p139 = scmp.eq.s32.totalorder %s10, 1
    %p140 = por %p138, %p139
    %p141 = scmp.ne.s32.totalorder %s133, %s136
    %p142 = scmp.eq.s32.totalorder %s10, 0
    %p143 = por %p141, %p142
    %p144 = scmp.ne.s32.totalorder %s133, %s136
    %p145 = scmp.eq.s32.totalorder %s15, 1
    %p146 = por %p144, %p145
    %p147 = scmp.ne.s32.totalorder %s136, %s137
    %p148 = scmp.eq.s32.totalorder %s15, 0
    %p149 = por %p147, %p148
    %p150 = scmp.ne.s32.totalorder %s136, %s137
    %p151 = scmp.eq.s32.totalorder %s16, 1
    %p152 = por %p150, %p151
    %p154 = scmp.ne.s32.totalorder %s137, %s153
    %p155 = scmp.eq.s32.totalorder %s16, 0
    %p156 = por %p154, %p155
    %p157 = scmp.le.s32.totalorder 1, %s10
    %p158 = scmp.lt.s32.totalorder %s10, 3
    %p159 = pnand %p157, %p158
    %p160 = pneg %p159
    // Predicated region
    $region9: #{from_rgb_3.1} parent=5 // pred_check
      _
    $region10: #{from_rgb_3.1} parent=5 // pred_check_branch
      %162 = sbr.rel (%p159) target = $region12
    $region11: #{from_rgb_3.1} parent=5 // pred_region
      %s163 = ssub.s32 %s10, 1
      // Predicated region
      $region13: #{from_rgb_3.1} parent=11 // pred_check
        %p164 = pneg %p74
      $region14: #{from_rgb_3.1} parent=11 // pred_check_branch
        %166 = sbr.rel (%p164) target = $region16
      $region15: #{from_rgb_3.1} parent=11 // pred_region
        %p167 = scmp.lt.s32.totalorder %s20, 0
        %s168 = scalar_select %p167, %s20, 0
        %s169 = smul.addr %s168, 8
        %s170 = scalar_lea.vmem %s1, %s169
      $region16: #{from_rgb_3.1} parent=11 // pred_fallthru
        _
      // Predicated region
      $region17: #{from_rgb_3.1} parent=11 // pred_check
        %p171 = pneg %p100
      $region18: #{from_rgb_3.1} parent=11 // pred_check_branch
        %173 = sbr.rel (%p171) target = $region20
      $region19: #{from_rgb_3.1} parent=11 // pred_region
        %p174 = scmp.lt.s32.totalorder %s20, 0
        %s175 = scalar_select %p174, %s20, 0
        %s176 = smul.addr %s175, 8
        %s177 = scalar_lea.vmem %s2, %s176
      $region20: #{from_rgb_3.1} parent=11 // pred_fallthru
        _
      // Predicated region
      $region21: #{from_rgb_3.1} parent=11 // pred_check
        %p178 = pneg %p121
      $region22: #{from_rgb_3.1} parent=11 // pred_check_branch
        %180 = sbr.rel (%p178) target = $region24
      $region23: #{from_rgb_3.1} parent=11 // pred_region
        _
      $region24: #{from_rgb_3.1} parent=11 // pred_fallthru
        _
    $region12: #{from_rgb_3.1} parent=5 // pred_fallthru
      _
    %p181 = scmp.lt.s32.totalorder %s10, 2
    // Predicated region
    $region25: #{from_rgb_3.1} parent=5 // pred_check
      %p182 = pneg %p181
    $region26: #{from_rgb_3.1} parent=5 // pred_check_branch
      %184 = sbr.rel (%p182) target = $region28
    $region27: #{from_rgb_3.1} parent=5 // pred_region
      // Predicated region
      $region29: #{from_rgb_3.1} parent=27 // pred_check
        %p185 = pneg %p42
      $region30: #{from_rgb_3.1} parent=27 // pred_check_branch
        %187 = sbr.rel (%p185) target = $region32
      $region31: #{from_rgb_3.1} parent=27 // pred_region
        %p188 = scmp.lt.s32.totalorder %s17, 1
        %s189 = scalar_select %p188, %s17, 1
        %s190 = smul.addr %s189, 3
        %s191 = smul.addr %s190, 8
        %s192 = scalar_lea.vmem %s0, %s191
      $region32: #{from_rgb_3.1} parent=27 // pred_fallthru
        _
    $region28: #{from_rgb_3.1} parent=5 // pred_fallthru
      _
    %p193 = scmp.le.s32.totalorder 1, %s10
    %p194 = scmp.lt.s32.totalorder %s10, 3
    %p195 = pnand %p193, %p194
    %p196 = pneg %p195
    // Predicated region
    $region33: #{from_rgb_3.1} parent=5 // pred_check
      _
    $region34: #{from_rgb_3.1} parent=5 // pred_check_branch
      %198 = sbr.rel (%p195) target = $region36
    $region35: #{from_rgb_3.1} parent=5 // pred_region
      %s199 = ssub.s32 %s10, 1
      %p200 = scmp.lt.s32.totalorder %s19, 1
      %s201 = scalar_select %p200, %s19, 1
      %s202 = smul.addr %s201, 3
      %s203 = smul.addr %s202, 8
      %s204 = scalar_lea.vmem %s0, %s203
      %p205 = pneg %p48
      %p206 = pneg %p45
      %p207 = scmp.lt.s32.totalorder %s20, 0
      %s208 = scalar_select %p207, %s20, 0
      %s209 = smul.addr %s208, 8
      %s210 = scalar_lea.vmem %s1, %s209
      %p211 = pneg %p74
      %p212 = pneg %p71
      %p213 = scmp.lt.s32.totalorder %s20, 0
      %s214 = scalar_select %p213, %s20, 0
      %s215 = smul.addr %s214, 8
      %s216 = scalar_lea.vmem %s2, %s215
      %p217 = pneg %p100
      %p218 = pneg %p97
      %p219 = pneg %p121
      %p220 = pneg %p118
      %p221 = pneg %p149
      %p222 = pneg %p146
      %p223 = scmp.lt.s32.totalorder %s19, 1
      %s224 = scalar_select %p223, %s19, 1
      %p225 = scmp.lt.s32.totalorder %s20, 0
      %s226 = scalar_select %p225, %s20, 0
      %s227 = smul.addr %s226, 3
      %s228 = smul.addr %s224, 3
      %s229 = sadd.s32 %s227, %s228
      %s230 = smul.addr %s229, 8
      %s231 = scalar_lea.vmem %s4, %s230
      %p232 = scmp.lt.s32.totalorder %s19, 1
      %s233 = scalar_select %p232, %s19, 1
      %s234 = smul.addr %s233, 3
      %s235 = smul.addr %s234, 8
      %s236 = scalar_lea.vmem %s0, %s235
      %p237 = scmp.lt.s32.totalorder %s20, 0
      %s238 = scalar_select %p237, %s20, 0
      %s239 = smul.addr %s238, 8
      %s240 = scalar_lea.vmem %s1, %s239
      %p241 = scmp.lt.s32.totalorder %s20, 0
      %s242 = scalar_select %p241, %s20, 0
      %s243 = smul.addr %s242, 8
      %s244 = scalar_lea.vmem %s2, %s243
      %p245 = scmp.lt.s32.totalorder %s19, 1
      %s246 = scalar_select %p245, %s19, 1
      %p247 = scmp.lt.s32.totalorder %s20, 0
      %s248 = scalar_select %p247, %s20, 0
      %s249 = smul.addr %s248, 3
      %s250 = smul.addr %s246, 3
      %s251 = sadd.s32 %s249, %s250
      %s252 = smul.addr %s251, 8
      %s253 = scalar_lea.vmem %s4, %s252
      %v254 = vld [vmem:[%s3] sm:$0x7]
      %v255 = vld [vmem:[%s236] sm:$0xff]
      %v256 = vld [vmem:[%s236 + $0x8] sm:$0xff]
      %v257 = vld [vmem:[%s236 + $0x10] sm:$0xff]
      %v258 = vld [vmem:[%s240] sm:$0xff]
      %s259 = scalar_lea.vmem %s240, 8
      %v260 = vld [vmem:[%s259] sm:$0xff]
      %264 = vrot.lane.b32.xlu0 %v255, 127
      %v265 = vpop.permute.xlu0 %264
      %266 = vrot.lane.b32.xlu0 %v256, 127
      %v267 = vpop.permute.xlu0 %266
      %268 = vrot.lane.b32.xlu0 %v257, 127
      %v269 = vpop.permute.xlu0 %268
      %vm270 = vcmask 1039360
      %v271 = vsel %vm270, %v265, %v267
      %v272 = vsel %vm270, %v267, %v269
      %vm276 = vcmask 64512
      %v278 = vsel %vm276, %v260, 0
      %280 = vmatprep.subr.mxu0 0.0
      %281 = vmatpush1.msra.mxu0 0.0
      %282 = vmatprep.subr.mxu0 0.0
      %283 = vmatpush1.msra.mxu0 0.0
      %284 = vmatprep.subr.mxu0 0.0
      %285 = vmatpush1.msra.mxu0 0.0
      %286 = vmatprep.subr.mxu0 0.0
      %287 = vmatpush1.msra.mxu0 0.0
      %288 = vmatprep.subr.mxu0 0.0
      %289 = vmatpush1.msra.mxu0 0.0
      %290 = vmatprep.subr.mxu0 0.0
      %291 = vmatpush1.msra.mxu0 0.0
      %292 = vmatprep.subr.mxu0 0.0
      %293 = vmatpush1.msra.mxu0 0.0
      %294 = vmatprep.subr.mxu0 0.0
      %295 = vmatpush1.msra.mxu0 0.0
      %296 = vmatprep.subr.mxu0 0.0
      %297 = vmatpush1.msra.mxu0 0.0
      %298 = vmatprep.subr.mxu0 0.0
      %299 = vmatpush1.msra.mxu0 0.0
      %300 = vmatprep.subr.mxu0 0.0
      %301 = vmatpush1.msra.mxu0 0.0
      %302 = vmatprep.subr.mxu0 0.0
      %303 = vmatpush1.msra.mxu0 0.0
      %304 = vmatprep.subr.mxu0 0.0
      %305 = vmatpush1.msra.mxu0 0.0
      %306 = vmatprep.subr.mxu0 0.0
      %307 = vmatpush1.msra.mxu0 0.0
      %308 = vmatprep.subr.mxu0 0.0
      %309 = vmatpush1.msra.mxu0 0.0
      %310 = vmatprep.subr.mxu0 %v272
      %311 = vmatpush1.msra.mxu0 %v271
      %312 = vmatprep.subr.mxu0 0.0
      %313 = vmatpush2.msra.mxu0 0.0
      %314 = vmatprep.subr.mxu0 0.0
      %315 = vmatpush2.msra.mxu0 0.0
      %316 = vmatprep.subr.mxu0 0.0
      %317 = vmatpush2.msra.mxu0 0.0
      %318 = vmatprep.subr.mxu0 0.0
      %319 = vmatpush2.msra.mxu0 0.0
      %320 = vmatprep.subr.mxu0 0.0
      %321 = vmatpush2.msra.mxu0 0.0
      %322 = vmatprep.subr.mxu0 0.0
      %323 = vmatpush2.msra.mxu0 0.0
      %324 = vmatprep.subr.mxu0 0.0
      %325 = vmatpush2.msra.mxu0 0.0
      %326 = vmatprep.subr.mxu0 0.0
      %327 = vmatpush2.msra.mxu0 0.0
      %328 = vmatprep.subr.mxu0 0.0
      %329 = vmatpush2.msra.mxu0 0.0
      %330 = vmatprep.subr.mxu0 0.0
      %331 = vmatpush2.msra.mxu0 0.0
      %332 = vmatprep.subr.mxu0 0.0
      %333 = vmatpush2.msra.mxu0 0.0
      %334 = vmatprep.subr.mxu0 0.0
      %335 = vmatpush2.msra.mxu0 0.0
      %336 = vmatprep.subr.mxu0 0.0
      %337 = vmatpush2.msra.mxu0 0.0
      %338 = vmatprep.subr.mxu0 0.0
      %339 = vmatpush2.msra.mxu0 0.0
      %340 = vmatprep.subr.mxu0 0.0
      %341 = vmatpush2.msra.mxu0 0.0
      %342 = vmatprep.subr.mxu0 0.0
      %343 = vmatpush2.msra.mxu0 0.0
      %344 = vmatprep.mubr.f32.mxu0 0.0
      %345 = vmatmul.mubr.f32.gmra.mxu0 %v278
      %v346 = vpop.f32.mrf.mxu0
      %v347 = vadd.f32 0.0, %v346
      %v348 = vpop.f32.mrf.mxu0
      %v349 = vadd.f32 0.0, %v348
      %350 = vdwg.mxu0
      %351 = vmatprep.subr.mxu0 0.0
      %352 = vmatpush1.msra.mxu0 0.0
      %353 = vmatprep.subr.mxu0 0.0
      %354 = vmatpush1.msra.mxu0 0.0
      %355 = vmatprep.subr.mxu0 0.0
      %356 = vmatpush1.msra.mxu0 0.0
      %357 = vmatprep.subr.mxu0 0.0
      %358 = vmatpush1.msra.mxu0 0.0
      %359 = vmatprep.subr.mxu0 0.0
      %360 = vmatpush1.msra.mxu0 0.0
      %361 = vmatprep.subr.mxu0 0.0
      %362 = vmatpush1.msra.mxu0 0.0
      %363 = vmatprep.subr.mxu0 0.0
      %364 = vmatpush1.msra.mxu0 0.0
      %365 = vmatprep.subr.mxu0 0.0
      %366 = vmatpush1.msra.mxu0 0.0
      %367 = vmatprep.subr.mxu0 0.0
      %368 = vmatpush1.msra.mxu0 0.0
      %369 = vmatprep.subr.mxu0 0.0
      %370 = vmatpush1.msra.mxu0 0.0
      %371 = vmatprep.subr.mxu0 0.0
      %372 = vmatpush1.msra.mxu0 0.0
      %373 = vmatprep.subr.mxu0 0.0
      %374 = vmatpush1.msra.mxu0 0.0
      %375 = vmatprep.subr.mxu0 0.0
      %376 = vmatpush1.msra.mxu0 0.0
      %377 = vmatprep.subr.mxu0 0.0
      %378 = vmatpush1.msra.mxu0 0.0
      %379 = vmatprep.subr.mxu0 0.0
      %380 = vmatpush1.msra.mxu0 0.0
      %381 = vmatprep.subr.mxu0 0.0
      %382 = vmatpush1.msra.mxu0 %v269
      %383 = vmatprep.subr.mxu0 0.0
      %384 = vmatpush2.msra.mxu0 0.0
      %385 = vmatprep.subr.mxu0 0.0
      %386 = vmatpush2.msra.mxu0 0.0
      %387 = vmatprep.subr.mxu0 0.0
      %388 = vmatpush2.msra.mxu0 0.0
      %389 = vmatprep.subr.mxu0 0.0
      %390 = vmatpush2.msra.mxu0 0.0
      %391 = vmatprep.subr.mxu0 0.0
      %392 = vmatpush2.msra.mxu0 0.0
      %393 = vmatprep.subr.mxu0 0.0
      %394 = vmatpush2.msra.mxu0 0.0
      %395 = vmatprep.subr.mxu0 0.0
      %396 = vmatpush2.msra.mxu0 0.0
      %397 = vmatprep.subr.mxu0 0.0
      %398 = vmatpush2.msra.mxu0 0.0
      %399 = vmatprep.subr.mxu0 0.0
      %400 = vmatpush2.msra.mxu0 0.0
      %401 = vmatprep.subr.mxu0 0.0
      %402 = vmatpush2.msra.mxu0 0.0
      %403 = vmatprep.subr.mxu0 0.0
      %404 = vmatpush2.msra.mxu0 0.0
      %405 = vmatprep.subr.mxu0 0.0
      %406 = vmatpush2.msra.mxu0 0.0
      %407 = vmatprep.subr.mxu0 0.0
      %408 = vmatpush2.msra.mxu0 0.0
      %409 = vmatprep.subr.mxu0 0.0
      %410 = vmatpush2.msra.mxu0 0.0
      %411 = vmatprep.subr.mxu0 0.0
      %412 = vmatpush2.msra.mxu0 0.0
      %413 = vmatprep.subr.mxu0 0.0
      %414 = vmatpush2.msra.mxu0 0.0
      %415 = vmatprep.mubr.f32.mxu0 0.0
      %416 = vmatmul.mubr.f32.gmra.mxu0 %v278
      %v417 = vpop.f32.mrf.mxu0
      %v418 = vadd.f32 0.0, %v417
      %v419 = vpop.f32.mrf.mxu0
      %420 = vdwg.mxu0
      %v422 = vsel %vm276, %v258, 0
      %424 = vmatprep.subr.mxu0 0.0
      %425 = vmatpush1.msra.mxu0 0.0
      %426 = vmatprep.subr.mxu0 0.0
      %427 = vmatpush1.msra.mxu0 0.0
      %428 = vmatprep.subr.mxu0 0.0
      %429 = vmatpush1.msra.mxu0 0.0
      %430 = vmatprep.subr.mxu0 0.0
      %431 = vmatpush1.msra.mxu0 0.0
      %432 = vmatprep.subr.mxu0 0.0
      %433 = vmatpush1.msra.mxu0 0.0
      %434 = vmatprep.subr.mxu0 0.0
      %435 = vmatpush1.msra.mxu0 0.0
      %436 = vmatprep.subr.mxu0 0.0
      %437 = vmatpush1.msra.mxu0 0.0
      %438 = vmatprep.subr.mxu0 0.0
      %439 = vmatpush1.msra.mxu0 0.0
      %440 = vmatprep.subr.mxu0 0.0
      %441 = vmatpush1.msra.mxu0 0.0
      %442 = vmatprep.subr.mxu0 0.0
      %443 = vmatpush1.msra.mxu0 0.0
      %444 = vmatprep.subr.mxu0 0.0
      %445 = vmatpush1.msra.mxu0 0.0
      %446 = vmatprep.subr.mxu0 0.0
      %447 = vmatpush1.msra.mxu0 0.0
      %448 = vmatprep.subr.mxu0 0.0
      %449 = vmatpush1.msra.mxu0 0.0
      %450 = vmatprep.subr.mxu0 0.0
      %451 = vmatpush1.msra.mxu0 0.0
      %452 = vmatprep.subr.mxu0 0.0
      %453 = vmatpush1.msra.mxu0 0.0
      %454 = vmatprep.subr.mxu0 %v256
      %455 = vmatpush1.msra.mxu0 %v255
      %456 = vmatprep.subr.mxu0 0.0
      %457 = vmatpush2.msra.mxu0 0.0
      %458 = vmatprep.subr.mxu0 0.0
      %459 = vmatpush2.msra.mxu0 0.0
      %460 = vmatprep.subr.mxu0 0.0
      %461 = vmatpush2.msra.mxu0 0.0
      %462 = vmatprep.subr.mxu0 0.0
      %463 = vmatpush2.msra.mxu0 0.0
      %464 = vmatprep.subr.mxu0 0.0
      %465 = vmatpush2.msra.mxu0 0.0
      %466 = vmatprep.subr.mxu0 0.0
      %467 = vmatpush2.msra.mxu0 0.0
      %468 = vmatprep.subr.mxu0 0.0
      %469 = vmatpush2.msra.mxu0 0.0
      %470 = vmatprep.subr.mxu0 0.0
      %471 = vmatpush2.msra.mxu0 0.0
      %472 = vmatprep.subr.mxu0 0.0
      %473 = vmatpush2.msra.mxu0 0.0
      %474 = vmatprep.subr.mxu0 0.0
      %475 = vmatpush2.msra.mxu0 0.0
      %476 = vmatprep.subr.mxu0 0.0
      %477 = vmatpush2.msra.mxu0 0.0
      %478 = vmatprep.subr.mxu0 0.0
      %479 = vmatpush2.msra.mxu0 0.0
      %480 = vmatprep.subr.mxu0 0.0
      %481 = vmatpush2.msra.mxu0 0.0
      %482 = vmatprep.subr.mxu0 0.0
      %483 = vmatpush2.msra.mxu0 0.0
      %484 = vmatprep.subr.mxu0 0.0
      %485 = vmatpush2.msra.mxu0 0.0
      %486 = vmatprep.subr.mxu0 0.0
      %487 = vmatpush2.msra.mxu0 0.0
      %488 = vmatprep.mubr.f32.mxu0 0.0
      %489 = vmatmul.mubr.f32.gmra.mxu0 %v422
      %v490 = vpop.f32.mrf.mxu0
      %v491 = vadd.f32 %v347, %v490
      %v492 = vpop.f32.mrf.mxu0
      %v493 = vadd.f32 %v349, %v492
      %494 = vdwg.mxu0
      %495 = vmatprep.subr.mxu0 0.0
      %496 = vmatpush1.msra.mxu0 0.0
      %497 = vmatprep.subr.mxu0 0.0
      %498 = vmatpush1.msra.mxu0 0.0
      %499 = vmatprep.subr.mxu0 0.0
      %500 = vmatpush1.msra.mxu0 0.0
      %501 = vmatprep.subr.mxu0 0.0
      %502 = vmatpush1.msra.mxu0 0.0
      %503 = vmatprep.subr.mxu0 0.0
      %504 = vmatpush1.msra.mxu0 0.0
      %505 = vmatprep.subr.mxu0 0.0
      %506 = vmatpush1.msra.mxu0 0.0
      %507 = vmatprep.subr.mxu0 0.0
      %508 = vmatpush1.msra.mxu0 0.0
      %509 = vmatprep.subr.mxu0 0.0
      %510 = vmatpush1.msra.mxu0 0.0
      %511 = vmatprep.subr.mxu0 0.0
      %512 = vmatpush1.msra.mxu0 0.0
      %513 = vmatprep.subr.mxu0 0.0
      %514 = vmatpush1.msra.mxu0 0.0
      %515 = vmatprep.subr.mxu0 0.0
      %516 = vmatpush1.msra.mxu0 0.0
      %517 = vmatprep.subr.mxu0 0.0
      %518 = vmatpush1.msra.mxu0 0.0
      %519 = vmatprep.subr.mxu0 0.0
      %520 = vmatpush1.msra.mxu0 0.0
      %521 = vmatprep.subr.mxu0 0.0
      %522 = vmatpush1.msra.mxu0 0.0
      %523 = vmatprep.subr.mxu0 0.0
      %524 = vmatpush1.msra.mxu0 0.0
      %525 = vmatprep.subr.mxu0 0.0
      %526 = vmatpush1.msra.mxu0 %v257
      %527 = vmatprep.subr.mxu0 0.0
      %528 = vmatpush2.msra.mxu0 0.0
      %529 = vmatprep.subr.mxu0 0.0
      %530 = vmatpush2.msra.mxu0 0.0
      %531 = vmatprep.subr.mxu0 0.0
      %532 = vmatpush2.msra.mxu0 0.0
      %533 = vmatprep.subr.mxu0 0.0
      %534 = vmatpush2.msra.mxu0 0.0
      %535 = vmatprep.subr.mxu0 0.0
      %536 = vmatpush2.msra.mxu0 0.0
      %537 = vmatprep.subr.mxu0 0.0
      %538 = vmatpush2.msra.mxu0 0.0
      %539 = vmatprep.subr.mxu0 0.0
      %540 = vmatpush2.msra.mxu0 0.0
      %541 = vmatprep.subr.mxu0 0.0
      %542 = vmatpush2.msra.mxu0 0.0
      %543 = vmatprep.subr.mxu0 0.0
      %544 = vmatpush2.msra.mxu0 0.0
      %545 = vmatprep.subr.mxu0 0.0
      %546 = vmatpush2.msra.mxu0 0.0
      %547 = vmatprep.subr.mxu0 0.0
      %548 = vmatpush2.msra.mxu0 0.0
      %549 = vmatprep.subr.mxu0 0.0
      %550 = vmatpush2.msra.mxu0 0.0
      %551 = vmatprep.subr.mxu0 0.0
      %552 = vmatpush2.msra.mxu0 0.0
      %553 = vmatprep.subr.mxu0 0.0
      %554 = vmatpush2.msra.mxu0 0.0
      %555 = vmatprep.subr.mxu0 0.0
      %556 = vmatpush2.msra.mxu0 0.0
      %557 = vmatprep.subr.mxu0 0.0
      %558 = vmatpush2.msra.mxu0 0.0
      %559 = vmatprep.mubr.f32.mxu0 0.0
      %560 = vmatmul.mubr.f32.gmra.mxu0 %v422
      %v561 = vpop.f32.mrf.mxu0
      %v562 = vadd.f32 %v418, %v561
      %v563 = vpop.f32.mrf.mxu0
      %564 = vdwg.mxu0
      %s565 = scalar_lea.vmem %s240, 16
      %v566 = vld [vmem:[%s565] sm:$0xff]
      %567 = vrot.lane.b32.xlu0 %v255, 126
      %v568 = vpop.permute.xlu0 %567
      %569 = vrot.lane.b32.xlu0 %v256, 126
      %v570 = vpop.permute.xlu0 %569
      %571 = vrot.lane.b32.xlu0 %v257, 126
      %v572 = vpop.permute.xlu0 %571
      %vm573 = vcmask 1031168
      %v574 = vsel %vm573, %v568, %v570
      %v575 = vsel %vm573, %v570, %v572
      %v580 = vsel %vm276, %v566, 0
      %582 = vmatprep.subr.mxu0 0.0
      %583 = vmatpush1.msra.mxu0 0.0
      %584 = vmatprep.subr.mxu0 0.0
      %585 = vmatpush1.msra.mxu0 0.0
      %586 = vmatprep.subr.mxu0 0.0
      %587 = vmatpush1.msra.mxu0 0.0
      %588 = vmatprep.subr.mxu0 0.0
      %589 = vmatpush1.msra.mxu0 0.0
      %590 = vmatprep.subr.mxu0 0.0
      %591 = vmatpush1.msra.mxu0 0.0
      %592 = vmatprep.subr.mxu0 0.0
      %593 = vmatpush1.msra.mxu0 0.0
      %594 = vmatprep.subr.mxu0 0.0
      %595 = vmatpush1.msra.mxu0 0.0
      %596 = vmatprep.subr.mxu0 0.0
      %597 = vmatpush1.msra.mxu0 0.0
      %598 = vmatprep.subr.mxu0 0.0
      %599 = vmatpush1.msra.mxu0 0.0
      %600 = vmatprep.subr.mxu0 0.0
      %601 = vmatpush1.msra.mxu0 0.0
      %602 = vmatprep.subr.mxu0 0.0
      %603 = vmatpush1.msra.mxu0 0.0
      %604 = vmatprep.subr.mxu0 0.0
      %605 = vmatpush1.msra.mxu0 0.0
      %606 = vmatprep.subr.mxu0 0.0
      %607 = vmatpush1.msra.mxu0 0.0
      %608 = vmatprep.subr.mxu0 0.0
      %609 = vmatpush1.msra.mxu0 0.0
      %610 = vmatprep.subr.mxu0 0.0
      %611 = vmatpush1.msra.mxu0 0.0
      %612 = vmatprep.subr.mxu0 %v575
      %613 = vmatpush1.msra.mxu0 %v574
      %614 = vmatprep.subr.mxu0 0.0
      %615 = vmatpush2.msra.mxu0 0.0
      %616 = vmatprep.subr.mxu0 0.0
      %617 = vmatpush2.msra.mxu0 0.0
      %618 = vmatprep.subr.mxu0 0.0
      %619 = vmatpush2.msra.mxu0 0.0
      %620 = vmatprep.subr.mxu0 0.0
      %621 = vmatpush2.msra.mxu0 0.0
      %622 = vmatprep.subr.mxu0 0.0
      %623 = vmatpush2.msra.mxu0 0.0
      %624 = vmatprep.subr.mxu0 0.0
      %625 = vmatpush2.msra.mxu0 0.0
      %626 = vmatprep.subr.mxu0 0.0
      %627 = vmatpush2.msra.mxu0 0.0
      %628 = vmatprep.subr.mxu0 0.0
      %629 = vmatpush2.msra.mxu0 0.0
      %630 = vmatprep.subr.mxu0 0.0
      %631 = vmatpush2.msra.mxu0 0.0
      %632 = vmatprep.subr.mxu0 0.0
      %633 = vmatpush2.msra.mxu0 0.0
      %634 = vmatprep.subr.mxu0 0.0
      %635 = vmatpush2.msra.mxu0 0.0
      %636 = vmatprep.subr.mxu0 0.0
      %637 = vmatpush2.msra.mxu0 0.0
      %638 = vmatprep.subr.mxu0 0.0
      %639 = vmatpush2.msra.mxu0 0.0
      %640 = vmatprep.subr.mxu0 0.0
      %641 = vmatpush2.msra.mxu0 0.0
      %642 = vmatprep.subr.mxu0 0.0
      %643 = vmatpush2.msra.mxu0 0.0
      %644 = vmatprep.subr.mxu0 0.0
      %645 = vmatpush2.msra.mxu0 0.0
      %646 = vmatprep.mubr.f32.mxu0 0.0
      %647 = vmatmul.mubr.f32.gmra.mxu0 %v580
      %v648 = vpop.f32.mrf.mxu0
      %v649 = vadd.f32 0.0, %v648
      %v650 = vpop.f32.mrf.mxu0
      %v651 = vadd.f32 0.0, %v650
      %652 = vdwg.mxu0
      %653 = vmatprep.subr.mxu0 0.0
      %654 = vmatpush1.msra.mxu0 0.0
      %655 = vmatprep.subr.mxu0 0.0
      %656 = vmatpush1.msra.mxu0 0.0
      %657 = vmatprep.subr.mxu0 0.0
      %658 = vmatpush1.msra.mxu0 0.0
      %659 = vmatprep.subr.mxu0 0.0
      %660 = vmatpush1.msra.mxu0 0.0
      %661 = vmatprep.subr.mxu0 0.0
      %662 = vmatpush1.msra.mxu0 0.0
      %663 = vmatprep.subr.mxu0 0.0
      %664 = vmatpush1.msra.mxu0 0.0
      %665 = vmatprep.subr.mxu0 0.0
      %666 = vmatpush1.msra.mxu0 0.0
      %667 = vmatprep.subr.mxu0 0.0
      %668 = vmatpush1.msra.mxu0 0.0
      %669 = vmatprep.subr.mxu0 0.0
      %670 = vmatpush1.msra.mxu0 0.0
      %671 = vmatprep.subr.mxu0 0.0
      %672 = vmatpush1.msra.mxu0 0.0
      %673 = vmatprep.subr.mxu0 0.0
      %674 = vmatpush1.msra.mxu0 0.0
      %675 = vmatprep.subr.mxu0 0.0
      %676 = vmatpush1.msra.mxu0 0.0
      %677 = vmatprep.subr.mxu0 0.0
      %678 = vmatpush1.msra.mxu0 0.0
      %679 = vmatprep.subr.mxu0 0.0
      %680 = vmatpush1.msra.mxu0 0.0
      %681 = vmatprep.subr.mxu0 0.0
      %682 = vmatpush1.msra.mxu0 0.0
      %683 = vmatprep.subr.mxu0 0.0
      %684 = vmatpush1.msra.mxu0 %v572
      %685 = vmatprep.subr.mxu0 0.0
      %686 = vmatpush2.msra.mxu0 0.0
      %687 = vmatprep.subr.mxu0 0.0
      %688 = vmatpush2.msra.mxu0 0.0
      %689 = vmatprep.subr.mxu0 0.0
      %690 = vmatpush2.msra.mxu0 0.0
      %691 = vmatprep.subr.mxu0 0.0
      %692 = vmatpush2.msra.mxu0 0.0
      %693 = vmatprep.subr.mxu0 0.0
      %694 = vmatpush2.msra.mxu0 0.0
      %695 = vmatprep.subr.mxu0 0.0
      %696 = vmatpush2.msra.mxu0 0.0
      %697 = vmatprep.subr.mxu0 0.0
      %698 = vmatpush2.msra.mxu0 0.0
      %699 = vmatprep.subr.mxu0 0.0
      %700 = vmatpush2.msra.mxu0 0.0
      %701 = vmatprep.subr.mxu0 0.0
      %702 = vmatpush2.msra.mxu0 0.0
      %703 = vmatprep.subr.mxu0 0.0
      %704 = vmatpush2.msra.mxu0 0.0
      %705 = vmatprep.subr.mxu0 0.0
      %706 = vmatpush2.msra.mxu0 0.0
      %707 = vmatprep.subr.mxu0 0.0
      %708 = vmatpush2.msra.mxu0 0.0
      %709 = vmatprep.subr.mxu0 0.0
      %710 = vmatpush2.msra.mxu0 0.0
      %711 = vmatprep.subr.mxu0 0.0
      %712 = vmatpush2.msra.mxu0 0.0
      %713 = vmatprep.subr.mxu0 0.0
      %714 = vmatpush2.msra.mxu0 0.0
      %715 = vmatprep.subr.mxu0 0.0
      %716 = vmatpush2.msra.mxu0 0.0
      %717 = vmatprep.mubr.f32.mxu0 0.0
      %718 = vmatmul.mubr.f32.gmra.mxu0 %v580
      %v719 = vpop.f32.mrf.mxu0
      %v720 = vadd.f32 0.0, %v719
      %v721 = vpop.f32.mrf.mxu0
      %722 = vdwg.mxu0
      %v723 = vadd.f32 %v491, %v649
      %v724 = vadd.f32 %v493, %v651
      %v725 = vadd.f32 %v562, %v720
      %s726 = scalar_lea.vmem %s240, 24
      %v727 = vld [vmem:[%s726] sm:$0xff]
      %728 = vrot.lane.b32.xlu0 %v255, 110
      %v729 = vpop.permute.xlu0 %728
      %730 = vrot.lane.b32.xlu0 %v256, 110
      %v731 = vpop.permute.xlu0 %730
      %732 = vrot.lane.b32.xlu0 %v257, 110
      %v733 = vpop.permute.xlu0 %732
      %vm734 = vcmask 900096
      %v735 = vsel %vm734, %v729, %v731
      %v736 = vsel %vm734, %v731, %v733
      %v741 = vsel %vm276, %v727, 0
      %743 = vmatprep.subr.mxu0 0.0
      %744 = vmatpush1.msra.mxu0 0.0
      %745 = vmatprep.subr.mxu0 0.0
      %746 = vmatpush1.msra.mxu0 0.0
      %747 = vmatprep.subr.mxu0 0.0
      %748 = vmatpush1.msra.mxu0 0.0
      %749 = vmatprep.subr.mxu0 0.0
      %750 = vmatpush1.msra.mxu0 0.0
      %751 = vmatprep.subr.mxu0 0.0
      %752 = vmatpush1.msra.mxu0 0.0
      %753 = vmatprep.subr.mxu0 0.0
      %754 = vmatpush1.msra.mxu0 0.0
      %755 = vmatprep.subr.mxu0 0.0
      %756 = vmatpush1.msra.mxu0 0.0
      %757 = vmatprep.subr.mxu0 0.0
      %758 = vmatpush1.msra.mxu0 0.0
      %759 = vmatprep.subr.mxu0 0.0
      %760 = vmatpush1.msra.mxu0 0.0
      %761 = vmatprep.subr.mxu0 0.0
      %762 = vmatpush1.msra.mxu0 0.0
      %763 = vmatprep.subr.mxu0 0.0
      %764 = vmatpush1.msra.mxu0 0.0
      %765 = vmatprep.subr.mxu0 0.0
      %766 = vmatpush1.msra.mxu0 0.0
      %767 = vmatprep.subr.mxu0 0.0
      %768 = vmatpush1.msra.mxu0 0.0
      %769 = vmatprep.subr.mxu0 0.0
      %770 = vmatpush1.msra.mxu0 0.0
      %771 = vmatprep.subr.mxu0 0.0
      %772 = vmatpush1.msra.mxu0 0.0
      %773 = vmatprep.subr.mxu0 %v736
      %774 = vmatpush1.msra.mxu0 %v735
      %775 = vmatprep.subr.mxu0 0.0
      %776 = vmatpush2.msra.mxu0 0.0
      %777 = vmatprep.subr.mxu0 0.0
      %778 = vmatpush2.msra.mxu0 0.0
      %779 = vmatprep.subr.mxu0 0.0
      %780 = vmatpush2.msra.mxu0 0.0
      %781 = vmatprep.subr.mxu0 0.0
      %782 = vmatpush2.msra.mxu0 0.0
      %783 = vmatprep.subr.mxu0 0.0
      %784 = vmatpush2.msra.mxu0 0.0
      %785 = vmatprep.subr.mxu0 0.0
      %786 = vmatpush2.msra.mxu0 0.0
      %787 = vmatprep.subr.mxu0 0.0
      %788 = vmatpush2.msra.mxu0 0.0
      %789 = vmatprep.subr.mxu0 0.0
      %790 = vmatpush2.msra.mxu0 0.0
      %791 = vmatprep.subr.mxu0 0.0
      %792 = vmatpush2.msra.mxu0 0.0
      %793 = vmatprep.subr.mxu0 0.0
      %794 = vmatpush2.msra.mxu0 0.0
      %795 = vmatprep.subr.mxu0 0.0
      %796 = vmatpush2.msra.mxu0 0.0
      %797 = vmatprep.subr.mxu0 0.0
      %798 = vmatpush2.msra.mxu0 0.0
      %799 = vmatprep.subr.mxu0 0.0
      %800 = vmatpush2.msra.mxu0 0.0
      %801 = vmatprep.subr.mxu0 0.0
      %802 = vmatpush2.msra.mxu0 0.0
      %803 = vmatprep.subr.mxu0 0.0
      %804 = vmatpush2.msra.mxu0 0.0
      %805 = vmatprep.subr.mxu0 0.0
      %806 = vmatpush2.msra.mxu0 0.0
      %807 = vmatprep.mubr.f32.mxu0 0.0
      %808 = vmatmul.mubr.f32.gmra.mxu0 %v741
      %v809 = vpop.f32.mrf.mxu0
      %v810 = vadd.f32 0.0, %v809
      %v811 = vpop.f32.mrf.mxu0
      %v812 = vadd.f32 0.0, %v811
      %813 = vdwg.mxu0
      %814 = vmatprep.subr.mxu0 0.0
      %815 = vmatpush1.msra.mxu0 0.0
      %816 = vmatprep.subr.mxu0 0.0
      %817 = vmatpush1.msra.mxu0 0.0
      %818 = vmatprep.subr.mxu0 0.0
      %819 = vmatpush1.msra.mxu0 0.0
      %820 = vmatprep.subr.mxu0 0.0
      %821 = vmatpush1.msra.mxu0 0.0
      %822 = vmatprep.subr.mxu0 0.0
      %823 = vmatpush1.msra.mxu0 0.0
      %824 = vmatprep.subr.mxu0 0.0
      %825 = vmatpush1.msra.mxu0 0.0
      %826 = vmatprep.subr.mxu0 0.0
      %827 = vmatpush1.msra.mxu0 0.0
      %828 = vmatprep.subr.mxu0 0.0
      %829 = vmatpush1.msra.mxu0 0.0
      %830 = vmatprep.subr.mxu0 0.0
      %831 = vmatpush1.msra.mxu0 0.0
      %832 = vmatprep.subr.mxu0 0.0
      %833 = vmatpush1.msra.mxu0 0.0
      %834 = vmatprep.subr.mxu0 0.0
      %835 = vmatpush1.msra.mxu0 0.0
      %836 = vmatprep.subr.mxu0 0.0
      %837 = vmatpush1.msra.mxu0 0.0
      %838 = vmatprep.subr.mxu0 0.0
      %839 = vmatpush1.msra.mxu0 0.0
      %840 = vmatprep.subr.mxu0 0.0
      %841 = vmatpush1.msra.mxu0 0.0
      %842 = vmatprep.subr.mxu0 0.0
      %843 = vmatpush1.msra.mxu0 0.0
      %844 = vmatprep.subr.mxu0 0.0
      %845 = vmatpush1.msra.mxu0 %v733
      %846 = vmatprep.subr.mxu0 0.0
      %847 = vmatpush2.msra.mxu0 0.0
      %848 = vmatprep.subr.mxu0 0.0
      %849 = vmatpush2.msra.mxu0 0.0
      %850 = vmatprep.subr.mxu0 0.0
      %851 = vmatpush2.msra.mxu0 0.0
      %852 = vmatprep.subr.mxu0 0.0
      %853 = vmatpush2.msra.mxu0 0.0
      %854 = vmatprep.subr.mxu0 0.0
      %855 = vmatpush2.msra.mxu0 0.0
      %856 = vmatprep.subr.mxu0 0.0
      %857 = vmatpush2.msra.mxu0 0.0
      %858 = vmatprep.subr.mxu0 0.0
      %859 = vmatpush2.msra.mxu0 0.0
      %860 = vmatprep.subr.mxu0 0.0
      %861 = vmatpush2.msra.mxu0 0.0
      %862 = vmatprep.subr.mxu0 0.0
      %863 = vmatpush2.msra.mxu0 0.0
      %864 = vmatprep.subr.mxu0 0.0
      %865 = vmatpush2.msra.mxu0 0.0
      %866 = vmatprep.subr.mxu0 0.0
      %867 = vmatpush2.msra.mxu0 0.0
      %868 = vmatprep.subr.mxu0 0.0
      %869 = vmatpush2.msra.mxu0 0.0
      %870 = vmatprep.subr.mxu0 0.0
      %871 = vmatpush2.msra.mxu0 0.0
      %872 = vmatprep.subr.mxu0 0.0
      %873 = vmatpush2.msra.mxu0 0.0
      %874 = vmatprep.subr.mxu0 0.0
      %875 = vmatpush2.msra.mxu0 0.0
      %876 = vmatprep.subr.mxu0 0.0
      %877 = vmatpush2.msra.mxu0 0.0
      %878 = vmatprep.mubr.f32.mxu0 0.0
      %879 = vmatmul.mubr.f32.gmra.mxu0 %v741
      %v880 = vpop.f32.mrf.mxu0
      %v881 = vadd.f32 0.0, %v880
      %v882 = vpop.f32.mrf.mxu0
      %883 = vdwg.mxu0
      %v884 = vadd.f32 %v723, %v810
      %v885 = vadd.f32 %v724, %v812
      %v886 = vadd.f32 %v725, %v881
      %s887 = scalar_lea.vmem %s240, 32
      %v888 = vld [vmem:[%s887] sm:$0xff]
      %889 = vrot.lane.b32.xlu0 %v255, 109
      %v890 = vpop.permute.xlu0 %889
      %891 = vrot.lane.b32.xlu0 %v256, 109
      %v892 = vpop.permute.xlu0 %891
      %893 = vrot.lane.b32.xlu0 %v257, 109
      %v894 = vpop.permute.xlu0 %893
      %vm895 = vcmask 891904
      %v896 = vsel %vm895, %v890, %v892
      %v897 = vsel %vm895, %v892, %v894
      %v902 = vsel %vm276, %v888, 0
      %904 = vmatprep.subr.mxu0 0.0
      %905 = vmatpush1.msra.mxu0 0.0
      %906 = vmatprep.subr.mxu0 0.0
      %907 = vmatpush1.msra.mxu0 0.0
      %908 = vmatprep.subr.mxu0 0.0
      %909 = vmatpush1.msra.mxu0 0.0
      %910 = vmatprep.subr.mxu0 0.0
      %911 = vmatpush1.msra.mxu0 0.0
      %912 = vmatprep.subr.mxu0 0.0
      %913 = vmatpush1.msra.mxu0 0.0
      %914 = vmatprep.subr.mxu0 0.0
      %915 = vmatpush1.msra.mxu0 0.0
      %916 = vmatprep.subr.mxu0 0.0
      %917 = vmatpush1.msra.mxu0 0.0
      %918 = vmatprep.subr.mxu0 0.0
      %919 = vmatpush1.msra.mxu0 0.0
      %920 = vmatprep.subr.mxu0 0.0
      %921 = vmatpush1.msra.mxu0 0.0
      %922 = vmatprep.subr.mxu0 0.0
      %923 = vmatpush1.msra.mxu0 0.0
      %924 = vmatprep.subr.mxu0 0.0
      %925 = vmatpush1.msra.mxu0 0.0
      %926 = vmatprep.subr.mxu0 0.0
      %927 = vmatpush1.msra.mxu0 0.0
      %928 = vmatprep.subr.mxu0 0.0
      %929 = vmatpush1.msra.mxu0 0.0
      %930 = vmatprep.subr.mxu0 0.0
      %931 = vmatpush1.msra.mxu0 0.0
      %932 = vmatprep.subr.mxu0 0.0
      %933 = vmatpush1.msra.mxu0 0.0
      %934 = vmatprep.subr.mxu0 %v897
      %935 = vmatpush1.msra.mxu0 %v896
      %936 = vmatprep.subr.mxu0 0.0
      %937 = vmatpush2.msra.mxu0 0.0
      %938 = vmatprep.subr.mxu0 0.0
      %939 = vmatpush2.msra.mxu0 0.0
      %940 = vmatprep.subr.mxu0 0.0
      %941 = vmatpush2.msra.mxu0 0.0
      %942 = vmatprep.subr.mxu0 0.0
      %943 = vmatpush2.msra.mxu0 0.0
      %944 = vmatprep.subr.mxu0 0.0
      %945 = vmatpush2.msra.mxu0 0.0
      %946 = vmatprep.subr.mxu0 0.0
      %947 = vmatpush2.msra.mxu0 0.0
      %948 = vmatprep.subr.mxu0 0.0
      %949 = vmatpush2.msra.mxu0 0.0
      %950 = vmatprep.subr.mxu0 0.0
      %951 = vmatpush2.msra.mxu0 0.0
      %952 = vmatprep.subr.mxu0 0.0
      %953 = vmatpush2.msra.mxu0 0.0
      %954 = vmatprep.subr.mxu0 0.0
      %955 = vmatpush2.msra.mxu0 0.0
      %956 = vmatprep.subr.mxu0 0.0
      %957 = vmatpush2.msra.mxu0 0.0
      %958 = vmatprep.subr.mxu0 0.0
      %959 = vmatpush2.msra.mxu0 0.0
      %960 = vmatprep.subr.mxu0 0.0
      %961 = vmatpush2.msra.mxu0 0.0
      %962 = vmatprep.subr.mxu0 0.0
      %963 = vmatpush2.msra.mxu0 0.0
      %964 = vmatprep.subr.mxu0 0.0
      %965 = vmatpush2.msra.mxu0 0.0
      %966 = vmatprep.subr.mxu0 0.0
      %967 = vmatpush2.msra.mxu0 0.0
      %968 = vmatprep.mubr.f32.mxu0 0.0
      %969 = vmatmul.mubr.f32.gmra.mxu0 %v902
      %v970 = vpop.f32.mrf.mxu0
      %v971 = vadd.f32 0.0, %v970
      %v972 = vpop.f32.mrf.mxu0
      %v973 = vadd.f32 0.0, %v972
      %974 = vdwg.mxu0
      %975 = vmatprep.subr.mxu0 0.0
      %976 = vmatpush1.msra.mxu0 0.0
      %977 = vmatprep.subr.mxu0 0.0
      %978 = vmatpush1.msra.mxu0 0.0
      %979 = vmatprep.subr.mxu0 0.0
      %980 = vmatpush1.msra.mxu0 0.0
      %981 = vmatprep.subr.mxu0 0.0
      %982 = vmatpush1.msra.mxu0 0.0
      %983 = vmatprep.subr.mxu0 0.0
      %984 = vmatpush1.msra.mxu0 0.0
      %985 = vmatprep.subr.mxu0 0.0
      %986 = vmatpush1.msra.mxu0 0.0
      %987 = vmatprep.subr.mxu0 0.0
      %988 = vmatpush1.msra.mxu0 0.0
      %989 = vmatprep.subr.mxu0 0.0
      %990 = vmatpush1.msra.mxu0 0.0
      %991 = vmatprep.subr.mxu0 0.0
      %992 = vmatpush1.msra.mxu0 0.0
      %993 = vmatprep.subr.mxu0 0.0
      %994 = vmatpush1.msra.mxu0 0.0
      %995 = vmatprep.subr.mxu0 0.0
      %996 = vmatpush1.msra.mxu0 0.0
      %997 = vmatprep.subr.mxu0 0.0
      %998 = vmatpush1.msra.mxu0 0.0
      %999 = vmatprep.subr.mxu0 0.0
      %1000 = vmatpush1.msra.mxu0 0.0
      %1001 = vmatprep.subr.mxu0 0.0
      %1002 = vmatpush1.msra.mxu0 0.0
      %1003 = vmatprep.subr.mxu0 0.0
      %1004 = vmatpush1.msra.mxu0 0.0
      %1005 = vmatprep.subr.mxu0 0.0
      %1006 = vmatpush1.msra.mxu0 %v894
      %1007 = vmatprep.subr.mxu0 0.0
      %1008 = vmatpush2.msra.mxu0 0.0
      %1009 = vmatprep.subr.mxu0 0.0
      %1010 = vmatpush2.msra.mxu0 0.0
      %1011 = vmatprep.subr.mxu0 0.0
      %1012 = vmatpush2.msra.mxu0 0.0
      %1013 = vmatprep.subr.mxu0 0.0
      %1014 = vmatpush2.msra.mxu0 0.0
      %1015 = vmatprep.subr.mxu0 0.0
      %1016 = vmatpush2.msra.mxu0 0.0
      %1017 = vmatprep.subr.mxu0 0.0
      %1018 = vmatpush2.msra.mxu0 0.0
      %1019 = vmatprep.subr.mxu0 0.0
      %1020 = vmatpush2.msra.mxu0 0.0
      %1021 = vmatprep.subr.mxu0 0.0
      %1022 = vmatpush2.msra.mxu0 0.0
      %1023 = vmatprep.subr.mxu0 0.0
      %1024 = vmatpush2.msra.mxu0 0.0
      %1025 = vmatprep.subr.mxu0 0.0
      %1026 = vmatpush2.msra.mxu0 0.0
      %1027 = vmatprep.subr.mxu0 0.0
      %1028 = vmatpush2.msra.mxu0 0.0
      %1029 = vmatprep.subr.mxu0 0.0
      %1030 = vmatpush2.msra.mxu0 0.0
      %1031 = vmatprep.subr.mxu0 0.0
      %1032 = vmatpush2.msra.mxu0 0.0
      %1033 = vmatprep.subr.mxu0 0.0
      %1034 = vmatpush2.msra.mxu0 0.0
      %1035 = vmatprep.subr.mxu0 0.0
      %1036 = vmatpush2.msra.mxu0 0.0
      %1037 = vmatprep.subr.mxu0 0.0
      %1038 = vmatpush2.msra.mxu0 0.0
      %1039 = vmatprep.mubr.f32.mxu0 0.0
      %1040 = vmatmul.mubr.f32.gmra.mxu0 %v902
      %v1041 = vpop.f32.mrf.mxu0
      %v1042 = vadd.f32 0.0, %v1041
      %v1043 = vpop.f32.mrf.mxu0
      %1044 = vdwg.mxu0
      %v1045 = vadd.f32 %v884, %v971
      %v1046 = vadd.f32 %v885, %v973
      %v1047 = vadd.f32 %v886, %v1042
      %s1048 = scalar_lea.vmem %s240, 40
      %v1049 = vld [vmem:[%s1048] sm:$0xff]
      %1050 = vrot.lane.b32.xlu0 %v255, 108
      %v1051 = vpop.permute.xlu0 %1050
      %1052 = vrot.lane.b32.xlu0 %v256, 108
      %v1053 = vpop.permute.xlu0 %1052
      %1054 = vrot.lane.b32.xlu0 %v257, 108
      %v1055 = vpop.permute.xlu0 %1054
      %vm1056 = vcmask 883712
      %v1057 = vsel %vm1056, %v1051, %v1053
      %v1058 = vsel %vm1056, %v1053, %v1055
      %v1063 = vsel %vm276, %v1049, 0
      %1065 = vmatprep.subr.mxu0 0.0
      %1066 = vmatpush1.msra.mxu0 0.0
      %1067 = vmatprep.subr.mxu0 0.0
      %1068 = vmatpush1.msra.mxu0 0.0
      %1069 = vmatprep.subr.mxu0 0.0
      %1070 = vmatpush1.msra.mxu0 0.0
      %1071 = vmatprep.subr.mxu0 0.0
      %1072 = vmatpush1.msra.mxu0 0.0
      %1073 = vmatprep.subr.mxu0 0.0
      %1074 = vmatpush1.msra.mxu0 0.0
      %1075 = vmatprep.subr.mxu0 0.0
      %1076 = vmatpush1.msra.mxu0 0.0
      %1077 = vmatprep.subr.mxu0 0.0
      %1078 = vmatpush1.msra.mxu0 0.0
      %1079 = vmatprep.subr.mxu0 0.0
      %1080 = vmatpush1.msra.mxu0 0.0
      %1081 = vmatprep.subr.mxu0 0.0
      %1082 = vmatpush1.msra.mxu0 0.0
      %1083 = vmatprep.subr.mxu0 0.0
      %1084 = vmatpush1.msra.mxu0 0.0
      %1085 = vmatprep.subr.mxu0 0.0
      %1086 = vmatpush1.msra.mxu0 0.0
      %1087 = vmatprep.subr.mxu0 0.0
      %1088 = vmatpush1.msra.mxu0 0.0
      %1089 = vmatprep.subr.mxu0 0.0
      %1090 = vmatpush1.msra.mxu0 0.0
      %1091 = vmatprep.subr.mxu0 0.0
      %1092 = vmatpush1.msra.mxu0 0.0
      %1093 = vmatprep.subr.mxu0 0.0
      %1094 = vmatpush1.msra.mxu0 0.0
      %1095 = vmatprep.subr.mxu0 %v1058
      %1096 = vmatpush1.msra.mxu0 %v1057
      %1097 = vmatprep.subr.mxu0 0.0
      %1098 = vmatpush2.msra.mxu0 0.0
      %1099 = vmatprep.subr.mxu0 0.0
      %1100 = vmatpush2.msra.mxu0 0.0
      %1101 = vmatprep.subr.mxu0 0.0
      %1102 = vmatpush2.msra.mxu0 0.0
      %1103 = vmatprep.subr.mxu0 0.0
      %1104 = vmatpush2.msra.mxu0 0.0
      %1105 = vmatprep.subr.mxu0 0.0
      %1106 = vmatpush2.msra.mxu0 0.0
      %1107 = vmatprep.subr.mxu0 0.0
      %1108 = vmatpush2.msra.mxu0 0.0
      %1109 = vmatprep.subr.mxu0 0.0
      %1110 = vmatpush2.msra.mxu0 0.0
      %1111 = vmatprep.subr.mxu0 0.0
      %1112 = vmatpush2.msra.mxu0 0.0
      %1113 = vmatprep.subr.mxu0 0.0
      %1114 = vmatpush2.msra.mxu0 0.0
      %1115 = vmatprep.subr.mxu0 0.0
      %1116 = vmatpush2.msra.mxu0 0.0
      %1117 = vmatprep.subr.mxu0 0.0
      %1118 = vmatpush2.msra.mxu0 0.0
      %1119 = vmatprep.subr.mxu0 0.0
      %1120 = vmatpush2.msra.mxu0 0.0
      %1121 = vmatprep.subr.mxu0 0.0
      %1122 = vmatpush2.msra.mxu0 0.0
      %1123 = vmatprep.subr.mxu0 0.0
      %1124 = vmatpush2.msra.mxu0 0.0
      %1125 = vmatprep.subr.mxu0 0.0
      %1126 = vmatpush2.msra.mxu0 0.0
      %1127 = vmatprep.subr.mxu0 0.0
      %1128 = vmatpush2.msra.mxu0 0.0
      %1129 = vmatprep.mubr.f32.mxu0 0.0
      %1130 = vmatmul.mubr.f32.gmra.mxu0 %v1063
      %v1131 = vpop.f32.mrf.mxu0
      %v1132 = vadd.f32 0.0, %v1131
      %v1133 = vpop.f32.mrf.mxu0
      %v1134 = vadd.f32 0.0, %v1133
      %1135 = vdwg.mxu0
      %1136 = vmatprep.subr.mxu0 0.0
      %1137 = vmatpush1.msra.mxu0 0.0
      %1138 = vmatprep.subr.mxu0 0.0
      %1139 = vmatpush1.msra.mxu0 0.0
      %1140 = vmatprep.subr.mxu0 0.0
      %1141 = vmatpush1.msra.mxu0 0.0
      %1142 = vmatprep.subr.mxu0 0.0
      %1143 = vmatpush1.msra.mxu0 0.0
      %1144 = vmatprep.subr.mxu0 0.0
      %1145 = vmatpush1.msra.mxu0 0.0
      %1146 = vmatprep.subr.mxu0 0.0
      %1147 = vmatpush1.msra.mxu0 0.0
      %1148 = vmatprep.subr.mxu0 0.0
      %1149 = vmatpush1.msra.mxu0 0.0
      %1150 = vmatprep.subr.mxu0 0.0
      %1151 = vmatpush1.msra.mxu0 0.0
      %1152 = vmatprep.subr.mxu0 0.0
      %1153 = vmatpush1.msra.mxu0 0.0
      %1154 = vmatprep.subr.mxu0 0.0
      %1155 = vmatpush1.msra.mxu0 0.0
      %1156 = vmatprep.subr.mxu0 0.0
      %1157 = vmatpush1.msra.mxu0 0.0
      %1158 = vmatprep.subr.mxu0 0.0
      %1159 = vmatpush1.msra.mxu0 0.0
      %1160 = vmatprep.subr.mxu0 0.0
      %1161 = vmatpush1.msra.mxu0 0.0
      %1162 = vmatprep.subr.mxu0 0.0
      %1163 = vmatpush1.msra.mxu0 0.0
      %1164 = vmatprep.subr.mxu0 0.0
      %1165 = vmatpush1.msra.mxu0 0.0
      %1166 = vmatprep.subr.mxu0 0.0
      %1167 = vmatpush1.msra.mxu0 %v1055
      %1168 = vmatprep.subr.mxu0 0.0
      %1169 = vmatpush2.msra.mxu0 0.0
      %1170 = vmatprep.subr.mxu0 0.0
      %1171 = vmatpush2.msra.mxu0 0.0
      %1172 = vmatprep.subr.mxu0 0.0
      %1173 = vmatpush2.msra.mxu0 0.0
      %1174 = vmatprep.subr.mxu0 0.0
      %1175 = vmatpush2.msra.mxu0 0.0
      %1176 = vmatprep.subr.mxu0 0.0
      %1177 = vmatpush2.msra.mxu0 0.0
      %1178 = vmatprep.subr.mxu0 0.0
      %1179 = vmatpush2.msra.mxu0 0.0
      %1180 = vmatprep.subr.mxu0 0.0
      %1181 = vmatpush2.msra.mxu0 0.0
      %1182 = vmatprep.subr.mxu0 0.0
      %1183 = vmatpush2.msra.mxu0 0.0
      %1184 = vmatprep.subr.mxu0 0.0
      %1185 = vmatpush2.msra.mxu0 0.0
      %1186 = vmatprep.subr.mxu0 0.0
      %1187 = vmatpush2.msra.mxu0 0.0
      %1188 = vmatprep.subr.mxu0 0.0
      %1189 = vmatpush2.msra.mxu0 0.0
      %1190 = vmatprep.subr.mxu0 0.0
      %1191 = vmatpush2.msra.mxu0 0.0
      %1192 = vmatprep.subr.mxu0 0.0
      %1193 = vmatpush2.msra.mxu0 0.0
      %1194 = vmatprep.subr.mxu0 0.0
      %1195 = vmatpush2.msra.mxu0 0.0
      %1196 = vmatprep.subr.mxu0 0.0
      %1197 = vmatpush2.msra.mxu0 0.0
      %1198 = vmatprep.subr.mxu0 0.0
      %1199 = vmatpush2.msra.mxu0 0.0
      %1200 = vmatprep.mubr.f32.mxu0 0.0
      %1201 = vmatmul.mubr.f32.gmra.mxu0 %v1063
      %v1202 = vpop.f32.mrf.mxu0
      %v1203 = vadd.f32 0.0, %v1202
      %v1204 = vpop.f32.mrf.mxu0
      %1205 = vdwg.mxu0
      %v1206 = vadd.f32 %v1045, %v1132
      %v1207 = vadd.f32 %v1046, %v1134
      %v1208 = vadd.f32 %v1047, %v1203
      %s1209 = scalar_lea.vmem %s240, 48
      %v1210 = vld [vmem:[%s1209] sm:$0xff]
      %1211 = vrot.lane.b32.xlu0 %v255, 92
      %v1212 = vpop.permute.xlu0 %1211
      %1213 = vrot.lane.b32.xlu0 %v256, 92
      %v1214 = vpop.permute.xlu0 %1213
      %1215 = vrot.lane.b32.xlu0 %v257, 92
      %v1216 = vpop.permute.xlu0 %1215
      %vm1217 = vcmask 752640
      %v1218 = vsel %vm1217, %v1212, %v1214
      %v1219 = vsel %vm1217, %v1214, %v1216
      %v1224 = vsel %vm276, %v1210, 0
      %1226 = vmatprep.subr.mxu0 0.0
      %1227 = vmatpush1.msra.mxu0 0.0
      %1228 = vmatprep.subr.mxu0 0.0
      %1229 = vmatpush1.msra.mxu0 0.0
      %1230 = vmatprep.subr.mxu0 0.0
      %1231 = vmatpush1.msra.mxu0 0.0
      %1232 = vmatprep.subr.mxu0 0.0
      %1233 = vmatpush1.msra.mxu0 0.0
      %1234 = vmatprep.subr.mxu0 0.0
      %1235 = vmatpush1.msra.mxu0 0.0
      %1236 = vmatprep.subr.mxu0 0.0
      %1237 = vmatpush1.msra.mxu0 0.0
      %1238 = vmatprep.subr.mxu0 0.0
      %1239 = vmatpush1.msra.mxu0 0.0
      %1240 = vmatprep.subr.mxu0 0.0
      %1241 = vmatpush1.msra.mxu0 0.0
      %1242 = vmatprep.subr.mxu0 0.0
      %1243 = vmatpush1.msra.mxu0 0.0
      %1244 = vmatprep.subr.mxu0 0.0
      %1245 = vmatpush1.msra.mxu0 0.0
      %1246 = vmatprep.subr.mxu0 0.0
      %1247 = vmatpush1.msra.mxu0 0.0
      %1248 = vmatprep.subr.mxu0 0.0
      %1249 = vmatpush1.msra.mxu0 0.0
      %1250 = vmatprep.subr.mxu0 0.0
      %1251 = vmatpush1.msra.mxu0 0.0
      %1252 = vmatprep.subr.mxu0 0.0
      %1253 = vmatpush1.msra.mxu0 0.0
      %1254 = vmatprep.subr.mxu0 0.0
      %1255 = vmatpush1.msra.mxu0 0.0
      %1256 = vmatprep.subr.mxu0 %v1219
      %1257 = vmatpush1.msra.mxu0 %v1218
      %1258 = vmatprep.subr.mxu0 0.0
      %1259 = vmatpush2.msra.mxu0 0.0
      %1260 = vmatprep.subr.mxu0 0.0
      %1261 = vmatpush2.msra.mxu0 0.0
      %1262 = vmatprep.subr.mxu0 0.0
      %1263 = vmatpush2.msra.mxu0 0.0
      %1264 = vmatprep.subr.mxu0 0.0
      %1265 = vmatpush2.msra.mxu0 0.0
      %1266 = vmatprep.subr.mxu0 0.0
      %1267 = vmatpush2.msra.mxu0 0.0
      %1268 = vmatprep.subr.mxu0 0.0
      %1269 = vmatpush2.msra.mxu0 0.0
      %1270 = vmatprep.subr.mxu0 0.0
      %1271 = vmatpush2.msra.mxu0 0.0
      %1272 = vmatprep.subr.mxu0 0.0
      %1273 = vmatpush2.msra.mxu0 0.0
      %1274 = vmatprep.subr.mxu0 0.0
      %1275 = vmatpush2.msra.mxu0 0.0
      %1276 = vmatprep.subr.mxu0 0.0
      %1277 = vmatpush2.msra.mxu0 0.0
      %1278 = vmatprep.subr.mxu0 0.0
      %1279 = vmatpush2.msra.mxu0 0.0
      %1280 = vmatprep.subr.mxu0 0.0
      %1281 = vmatpush2.msra.mxu0 0.0
      %1282 = vmatprep.subr.mxu0 0.0
      %1283 = vmatpush2.msra.mxu0 0.0
      %1284 = vmatprep.subr.mxu0 0.0
      %1285 = vmatpush2.msra.mxu0 0.0
      %1286 = vmatprep.subr.mxu0 0.0
      %1287 = vmatpush2.msra.mxu0 0.0
      %1288 = vmatprep.subr.mxu0 0.0
      %1289 = vmatpush2.msra.mxu0 0.0
      %1290 = vmatprep.mubr.f32.mxu0 0.0
      %1291 = vmatmul.mubr.f32.gmra.mxu0 %v1224
      %v1292 = vpop.f32.mrf.mxu0
      %v1293 = vadd.f32 0.0, %v1292
      %v1294 = vpop.f32.mrf.mxu0
      %v1295 = vadd.f32 0.0, %v1294
      %1296 = vdwg.mxu0
      %1297 = vmatprep.subr.mxu0 0.0
      %1298 = vmatpush1.msra.mxu0 0.0
      %1299 = vmatprep.subr.mxu0 0.0
      %1300 = vmatpush1.msra.mxu0 0.0
      %1301 = vmatprep.subr.mxu0 0.0
      %1302 = vmatpush1.msra.mxu0 0.0
      %1303 = vmatprep.subr.mxu0 0.0
      %1304 = vmatpush1.msra.mxu0 0.0
      %1305 = vmatprep.subr.mxu0 0.0
      %1306 = vmatpush1.msra.mxu0 0.0
      %1307 = vmatprep.subr.mxu0 0.0
      %1308 = vmatpush1.msra.mxu0 0.0
      %1309 = vmatprep.subr.mxu0 0.0
      %1310 = vmatpush1.msra.mxu0 0.0
      %1311 = vmatprep.subr.mxu0 0.0
      %1312 = vmatpush1.msra.mxu0 0.0
      %1313 = vmatprep.subr.mxu0 0.0
      %1314 = vmatpush1.msra.mxu0 0.0
      %1315 = vmatprep.subr.mxu0 0.0
      %1316 = vmatpush1.msra.mxu0 0.0
      %1317 = vmatprep.subr.mxu0 0.0
      %1318 = vmatpush1.msra.mxu0 0.0
      %1319 = vmatprep.subr.mxu0 0.0
      %1320 = vmatpush1.msra.mxu0 0.0
      %1321 = vmatprep.subr.mxu0 0.0
      %1322 = vmatpush1.msra.mxu0 0.0
      %1323 = vmatprep.subr.mxu0 0.0
      %1324 = vmatpush1.msra.mxu0 0.0
      %1325 = vmatprep.subr.mxu0 0.0
      %1326 = vmatpush1.msra.mxu0 0.0
      %1327 = vmatprep.subr.mxu0 0.0
      %1328 = vmatpush1.msra.mxu0 %v1216
      %1329 = vmatprep.subr.mxu0 0.0
      %1330 = vmatpush2.msra.mxu0 0.0
      %1331 = vmatprep.subr.mxu0 0.0
      %1332 = vmatpush2.msra.mxu0 0.0
      %1333 = vmatprep.subr.mxu0 0.0
      %1334 = vmatpush2.msra.mxu0 0.0
      %1335 = vmatprep.subr.mxu0 0.0
      %1336 = vmatpush2.msra.mxu0 0.0
      %1337 = vmatprep.subr.mxu0 0.0
      %1338 = vmatpush2.msra.mxu0 0.0
      %1339 = vmatprep.subr.mxu0 0.0
      %1340 = vmatpush2.msra.mxu0 0.0
      %1341 = vmatprep.subr.mxu0 0.0
      %1342 = vmatpush2.msra.mxu0 0.0
      %1343 = vmatprep.subr.mxu0 0.0
      %1344 = vmatpush2.msra.mxu0 0.0
      %1345 = vmatprep.subr.mxu0 0.0
      %1346 = vmatpush2.msra.mxu0 0.0
      %1347 = vmatprep.subr.mxu0 0.0
      %1348 = vmatpush2.msra.mxu0 0.0
      %1349 = vmatprep.subr.mxu0 0.0
      %1350 = vmatpush2.msra.mxu0 0.0
      %1351 = vmatprep.subr.mxu0 0.0
      %1352 = vmatpush2.msra.mxu0 0.0
      %1353 = vmatprep.subr.mxu0 0.0
      %1354 = vmatpush2.msra.mxu0 0.0
      %1355 = vmatprep.subr.mxu0 0.0
      %1356 = vmatpush2.msra.mxu0 0.0
      %1357 = vmatprep.subr.mxu0 0.0
      %1358 = vmatpush2.msra.mxu0 0.0
      %1359 = vmatprep.subr.mxu0 0.0
      %1360 = vmatpush2.msra.mxu0 0.0
      %1361 = vmatprep.mubr.f32.mxu0 0.0
      %1362 = vmatmul.mubr.f32.gmra.mxu0 %v1224
      %v1363 = vpop.f32.mrf.mxu0
      %v1364 = vadd.f32 0.0, %v1363
      %v1365 = vpop.f32.mrf.mxu0
      %1366 = vdwg.mxu0
      %v1367 = vadd.f32 %v1206, %v1293
      %v1368 = vadd.f32 %v1207, %v1295
      %v1369 = vadd.f32 %v1208, %v1364
      %s1370 = scalar_lea.vmem %s240, 56
      %v1371 = vld [vmem:[%s1370] sm:$0xff]
      %1372 = vrot.lane.b32.xlu0 %v255, 91
      %v1373 = vpop.permute.xlu0 %1372
      %1374 = vrot.lane.b32.xlu0 %v256, 91
      %v1375 = vpop.permute.xlu0 %1374
      %1376 = vrot.lane.b32.xlu0 %v257, 91
      %v1377 = vpop.permute.xlu0 %1376
      %vm1378 = vcmask 744448
      %v1379 = vsel %vm1378, %v1373, %v1375
      %v1380 = vsel %vm1378, %v1375, %v1377
      %v1385 = vsel %vm276, %v1371, 0
      %1387 = vmatprep.subr.mxu0 0.0
      %1388 = vmatpush1.msra.mxu0 0.0
      %1389 = vmatprep.subr.mxu0 0.0
      %1390 = vmatpush1.msra.mxu0 0.0
      %1391 = vmatprep.subr.mxu0 0.0
      %1392 = vmatpush1.msra.mxu0 0.0
      %1393 = vmatprep.subr.mxu0 0.0
      %1394 = vmatpush1.msra.mxu0 0.0
      %1395 = vmatprep.subr.mxu0 0.0
      %1396 = vmatpush1.msra.mxu0 0.0
      %1397 = vmatprep.subr.mxu0 0.0
      %1398 = vmatpush1.msra.mxu0 0.0
      %1399 = vmatprep.subr.mxu0 0.0
      %1400 = vmatpush1.msra.mxu0 0.0
      %1401 = vmatprep.subr.mxu0 0.0
      %1402 = vmatpush1.msra.mxu0 0.0
      %1403 = vmatprep.subr.mxu0 0.0
      %1404 = vmatpush1.msra.mxu0 0.0
      %1405 = vmatprep.subr.mxu0 0.0
      %1406 = vmatpush1.msra.mxu0 0.0
      %1407 = vmatprep.subr.mxu0 0.0
      %1408 = vmatpush1.msra.mxu0 0.0
      %1409 = vmatprep.subr.mxu0 0.0
      %1410 = vmatpush1.msra.mxu0 0.0
      %1411 = vmatprep.subr.mxu0 0.0
      %1412 = vmatpush1.msra.mxu0 0.0
      %1413 = vmatprep.subr.mxu0 0.0
      %1414 = vmatpush1.msra.mxu0 0.0
      %1415 = vmatprep.subr.mxu0 0.0
      %1416 = vmatpush1.msra.mxu0 0.0
      %1417 = vmatprep.subr.mxu0 %v1380
      %1418 = vmatpush1.msra.mxu0 %v1379
      %1419 = vmatprep.subr.mxu0 0.0
      %1420 = vmatpush2.msra.mxu0 0.0
      %1421 = vmatprep.subr.mxu0 0.0
      %1422 = vmatpush2.msra.mxu0 0.0
      %1423 = vmatprep.subr.mxu0 0.0
      %1424 = vmatpush2.msra.mxu0 0.0
      %1425 = vmatprep.subr.mxu0 0.0
      %1426 = vmatpush2.msra.mxu0 0.0
      %1427 = vmatprep.subr.mxu0 0.0
      %1428 = vmatpush2.msra.mxu0 0.0
      %1429 = vmatprep.subr.mxu0 0.0
      %1430 = vmatpush2.msra.mxu0 0.0
      %1431 = vmatprep.subr.mxu0 0.0
      %1432 = vmatpush2.msra.mxu0 0.0
      %1433 = vmatprep.subr.mxu0 0.0
      %1434 = vmatpush2.msra.mxu0 0.0
      %1435 = vmatprep.subr.mxu0 0.0
      %1436 = vmatpush2.msra.mxu0 0.0
      %1437 = vmatprep.subr.mxu0 0.0
      %1438 = vmatpush2.msra.mxu0 0.0
      %1439 = vmatprep.subr.mxu0 0.0
      %1440 = vmatpush2.msra.mxu0 0.0
      %1441 = vmatprep.subr.mxu0 0.0
      %1442 = vmatpush2.msra.mxu0 0.0
      %1443 = vmatprep.subr.mxu0 0.0
      %1444 = vmatpush2.msra.mxu0 0.0
      %1445 = vmatprep.subr.mxu0 0.0
      %1446 = vmatpush2.msra.mxu0 0.0
      %1447 = vmatprep.subr.mxu0 0.0
      %1448 = vmatpush2.msra.mxu0 0.0
      %1449 = vmatprep.subr.mxu0 0.0
      %1450 = vmatpush2.msra.mxu0 0.0
      %1451 = vmatprep.mubr.f32.mxu0 0.0
      %1452 = vmatmul.mubr.f32.gmra.mxu0 %v1385
      %v1453 = vpop.f32.mrf.mxu0
      %v1454 = vadd.f32 0.0, %v1453
      %v1455 = vpop.f32.mrf.mxu0
      %v1456 = vadd.f32 0.0, %v1455
      %1457 = vdwg.mxu0
      %1458 = vmatprep.subr.mxu0 0.0
      %1459 = vmatpush1.msra.mxu0 0.0
      %1460 = vmatprep.subr.mxu0 0.0
      %1461 = vmatpush1.msra.mxu0 0.0
      %1462 = vmatprep.subr.mxu0 0.0
      %1463 = vmatpush1.msra.mxu0 0.0
      %1464 = vmatprep.subr.mxu0 0.0
      %1465 = vmatpush1.msra.mxu0 0.0
      %1466 = vmatprep.subr.mxu0 0.0
      %1467 = vmatpush1.msra.mxu0 0.0
      %1468 = vmatprep.subr.mxu0 0.0
      %1469 = vmatpush1.msra.mxu0 0.0
      %1470 = vmatprep.subr.mxu0 0.0
      %1471 = vmatpush1.msra.mxu0 0.0
      %1472 = vmatprep.subr.mxu0 0.0
      %1473 = vmatpush1.msra.mxu0 0.0
      %1474 = vmatprep.subr.mxu0 0.0
      %1475 = vmatpush1.msra.mxu0 0.0
      %1476 = vmatprep.subr.mxu0 0.0
      %1477 = vmatpush1.msra.mxu0 0.0
      %1478 = vmatprep.subr.mxu0 0.0
      %1479 = vmatpush1.msra.mxu0 0.0
      %1480 = vmatprep.subr.mxu0 0.0
      %1481 = vmatpush1.msra.mxu0 0.0
      %1482 = vmatprep.subr.mxu0 0.0
      %1483 = vmatpush1.msra.mxu0 0.0
      %1484 = vmatprep.subr.mxu0 0.0
      %1485 = vmatpush1.msra.mxu0 0.0
      %1486 = vmatprep.subr.mxu0 0.0
      %1487 = vmatpush1.msra.mxu0 0.0
      %1488 = vmatprep.subr.mxu0 0.0
      %1489 = vmatpush1.msra.mxu0 %v1377
      %1490 = vmatprep.subr.mxu0 0.0
      %1491 = vmatpush2.msra.mxu0 0.0
      %1492 = vmatprep.subr.mxu0 0.0
      %1493 = vmatpush2.msra.mxu0 0.0
      %1494 = vmatprep.subr.mxu0 0.0
      %1495 = vmatpush2.msra.mxu0 0.0
      %1496 = vmatprep.subr.mxu0 0.0
      %1497 = vmatpush2.msra.mxu0 0.0
      %1498 = vmatprep.subr.mxu0 0.0
      %1499 = vmatpush2.msra.mxu0 0.0
      %1500 = vmatprep.subr.mxu0 0.0
      %1501 = vmatpush2.msra.mxu0 0.0
      %1502 = vmatprep.subr.mxu0 0.0
      %1503 = vmatpush2.msra.mxu0 0.0
      %1504 = vmatprep.subr.mxu0 0.0
      %1505 = vmatpush2.msra.mxu0 0.0
      %1506 = vmatprep.subr.mxu0 0.0
      %1507 = vmatpush2.msra.mxu0 0.0
      %1508 = vmatprep.subr.mxu0 0.0
      %1509 = vmatpush2.msra.mxu0 0.0
      %1510 = vmatprep.subr.mxu0 0.0
      %1511 = vmatpush2.msra.mxu0 0.0
      %1512 = vmatprep.subr.mxu0 0.0
      %1513 = vmatpush2.msra.mxu0 0.0
      %1514 = vmatprep.subr.mxu0 0.0
      %1515 = vmatpush2.msra.mxu0 0.0
      %1516 = vmatprep.subr.mxu0 0.0
      %1517 = vmatpush2.msra.mxu0 0.0
      %1518 = vmatprep.subr.mxu0 0.0
      %1519 = vmatpush2.msra.mxu0 0.0
      %1520 = vmatprep.subr.mxu0 0.0
      %1521 = vmatpush2.msra.mxu0 0.0
      %1522 = vmatprep.mubr.f32.mxu0 0.0
      %1523 = vmatmul.mubr.f32.gmra.mxu0 %v1385
      %v1524 = vpop.f32.mrf.mxu0
      %v1525 = vadd.f32 0.0, %v1524
      %v1526 = vpop.f32.mrf.mxu0
      %1527 = vdwg.mxu0
      %v1528 = vadd.f32 %v1367, %v1454
      %v1529 = vadd.f32 %v1368, %v1456
      %v1530 = vadd.f32 %v1369, %v1525
      %s1531 = scalar_lea.vmem %s240, 64
      %v1532 = vld [vmem:[%s1531] sm:$0xff]
      %1533 = vrot.lane.b32.xlu0 %v255, 90
      %v1534 = vpop.permute.xlu0 %1533
      %1535 = vrot.lane.b32.xlu0 %v256, 90
      %v1536 = vpop.permute.xlu0 %1535
      %1537 = vrot.lane.b32.xlu0 %v257, 90
      %v1538 = vpop.permute.xlu0 %1537
      %vm1539 = vcmask 736256
      %v1540 = vsel %vm1539, %v1534, %v1536
      %v1541 = vsel %vm1539, %v1536, %v1538
      %v1546 = vsel %vm276, %v1532, 0
      %1548 = vmatprep.subr.mxu0 0.0
      %1549 = vmatpush1.msra.mxu0 0.0
      %1550 = vmatprep.subr.mxu0 0.0
      %1551 = vmatpush1.msra.mxu0 0.0
      %1552 = vmatprep.subr.mxu0 0.0
      %1553 = vmatpush1.msra.mxu0 0.0
      %1554 = vmatprep.subr.mxu0 0.0
      %1555 = vmatpush1.msra.mxu0 0.0
      %1556 = vmatprep.subr.mxu0 0.0
      %1557 = vmatpush1.msra.mxu0 0.0
      %1558 = vmatprep.subr.mxu0 0.0
      %1559 = vmatpush1.msra.mxu0 0.0
      %1560 = vmatprep.subr.mxu0 0.0
      %1561 = vmatpush1.msra.mxu0 0.0
      %1562 = vmatprep.subr.mxu0 0.0
      %1563 = vmatpush1.msra.mxu0 0.0
      %1564 = vmatprep.subr.mxu0 0.0
      %1565 = vmatpush1.msra.mxu0 0.0
      %1566 = vmatprep.subr.mxu0 0.0
      %1567 = vmatpush1.msra.mxu0 0.0
      %1568 = vmatprep.subr.mxu0 0.0
      %1569 = vmatpush1.msra.mxu0 0.0
      %1570 = vmatprep.subr.mxu0 0.0
      %1571 = vmatpush1.msra.mxu0 0.0
      %1572 = vmatprep.subr.mxu0 0.0
      %1573 = vmatpush1.msra.mxu0 0.0
      %1574 = vmatprep.subr.mxu0 0.0
      %1575 = vmatpush1.msra.mxu0 0.0
      %1576 = vmatprep.subr.mxu0 0.0
      %1577 = vmatpush1.msra.mxu0 0.0
      %1578 = vmatprep.subr.mxu0 %v1541
      %1579 = vmatpush1.msra.mxu0 %v1540
      %1580 = vmatprep.subr.mxu0 0.0
      %1581 = vmatpush2.msra.mxu0 0.0
      %1582 = vmatprep.subr.mxu0 0.0
      %1583 = vmatpush2.msra.mxu0 0.0
      %1584 = vmatprep.subr.mxu0 0.0
      %1585 = vmatpush2.msra.mxu0 0.0
      %1586 = vmatprep.subr.mxu0 0.0
      %1587 = vmatpush2.msra.mxu0 0.0
      %1588 = vmatprep.subr.mxu0 0.0
      %1589 = vmatpush2.msra.mxu0 0.0
      %1590 = vmatprep.subr.mxu0 0.0
      %1591 = vmatpush2.msra.mxu0 0.0
      %1592 = vmatprep.subr.mxu0 0.0
      %1593 = vmatpush2.msra.mxu0 0.0
      %1594 = vmatprep.subr.mxu0 0.0
      %1595 = vmatpush2.msra.mxu0 0.0
      %1596 = vmatprep.subr.mxu0 0.0
      %1597 = vmatpush2.msra.mxu0 0.0
      %1598 = vmatprep.subr.mxu0 0.0
      %1599 = vmatpush2.msra.mxu0 0.0
      %1600 = vmatprep.subr.mxu0 0.0
      %1601 = vmatpush2.msra.mxu0 0.0
      %1602 = vmatprep.subr.mxu0 0.0
      %1603 = vmatpush2.msra.mxu0 0.0
      %1604 = vmatprep.subr.mxu0 0.0
      %1605 = vmatpush2.msra.mxu0 0.0
      %1606 = vmatprep.subr.mxu0 0.0
      %1607 = vmatpush2.msra.mxu0 0.0
      %1608 = vmatprep.subr.mxu0 0.0
      %1609 = vmatpush2.msra.mxu0 0.0
      %1610 = vmatprep.subr.mxu0 0.0
      %1611 = vmatpush2.msra.mxu0 0.0
      %1612 = vmatprep.mubr.f32.mxu0 0.0
      %1613 = vmatmul.mubr.f32.gmra.mxu0 %v1546
      %v1614 = vpop.f32.mrf.mxu0
      %v1615 = vadd.f32 0.0, %v1614
      %v1616 = vpop.f32.mrf.mxu0
      %v1617 = vadd.f32 0.0, %v1616
      %1618 = vdwg.mxu0
      %1619 = vmatprep.subr.mxu0 0.0
      %1620 = vmatpush1.msra.mxu0 0.0
      %1621 = vmatprep.subr.mxu0 0.0
      %1622 = vmatpush1.msra.mxu0 0.0
      %1623 = vmatprep.subr.mxu0 0.0
      %1624 = vmatpush1.msra.mxu0 0.0
      %1625 = vmatprep.subr.mxu0 0.0
      %1626 = vmatpush1.msra.mxu0 0.0
      %1627 = vmatprep.subr.mxu0 0.0
      %1628 = vmatpush1.msra.mxu0 0.0
      %1629 = vmatprep.subr.mxu0 0.0
      %1630 = vmatpush1.msra.mxu0 0.0
      %1631 = vmatprep.subr.mxu0 0.0
      %1632 = vmatpush1.msra.mxu0 0.0
      %1633 = vmatprep.subr.mxu0 0.0
      %1634 = vmatpush1.msra.mxu0 0.0
      %1635 = vmatprep.subr.mxu0 0.0
      %1636 = vmatpush1.msra.mxu0 0.0
      %1637 = vmatprep.subr.mxu0 0.0
      %1638 = vmatpush1.msra.mxu0 0.0
      %1639 = vmatprep.subr.mxu0 0.0
      %1640 = vmatpush1.msra.mxu0 0.0
      %1641 = vmatprep.subr.mxu0 0.0
      %1642 = vmatpush1.msra.mxu0 0.0
      %1643 = vmatprep.subr.mxu0 0.0
      %1644 = vmatpush1.msra.mxu0 0.0
      %1645 = vmatprep.subr.mxu0 0.0
      %1646 = vmatpush1.msra.mxu0 0.0
      %1647 = vmatprep.subr.mxu0 0.0
      %1648 = vmatpush1.msra.mxu0 0.0
      %1649 = vmatprep.subr.mxu0 0.0
      %1650 = vmatpush1.msra.mxu0 %v1538
      %1651 = vmatprep.subr.mxu0 0.0
      %1652 = vmatpush2.msra.mxu0 0.0
      %1653 = vmatprep.subr.mxu0 0.0
      %1654 = vmatpush2.msra.mxu0 0.0
      %1655 = vmatprep.subr.mxu0 0.0
      %1656 = vmatpush2.msra.mxu0 0.0
      %1657 = vmatprep.subr.mxu0 0.0
      %1658 = vmatpush2.msra.mxu0 0.0
      %1659 = vmatprep.subr.mxu0 0.0
      %1660 = vmatpush2.msra.mxu0 0.0
      %1661 = vmatprep.subr.mxu0 0.0
      %1662 = vmatpush2.msra.mxu0 0.0
      %1663 = vmatprep.subr.mxu0 0.0
      %1664 = vmatpush2.msra.mxu0 0.0
      %1665 = vmatprep.subr.mxu0 0.0
      %1666 = vmatpush2.msra.mxu0 0.0
      %1667 = vmatprep.subr.mxu0 0.0
      %1668 = vmatpush2.msra.mxu0 0.0
      %1669 = vmatprep.subr.mxu0 0.0
      %1670 = vmatpush2.msra.mxu0 0.0
      %1671 = vmatprep.subr.mxu0 0.0
      %1672 = vmatpush2.msra.mxu0 0.0
      %1673 = vmatprep.subr.mxu0 0.0
      %1674 = vmatpush2.msra.mxu0 0.0
      %1675 = vmatprep.subr.mxu0 0.0
      %1676 = vmatpush2.msra.mxu0 0.0
      %1677 = vmatprep.subr.mxu0 0.0
      %1678 = vmatpush2.msra.mxu0 0.0
      %1679 = vmatprep.subr.mxu0 0.0
      %1680 = vmatpush2.msra.mxu0 0.0
      %1681 = vmatprep.subr.mxu0 0.0
      %1682 = vmatpush2.msra.mxu0 0.0
      %1683 = vmatprep.mubr.f32.mxu0 0.0
      %1684 = vmatmul.mubr.f32.gmra.mxu0 %v1546
      %v1685 = vpop.f32.mrf.mxu0
      %v1686 = vadd.f32 0.0, %v1685
      %v1687 = vpop.f32.mrf.mxu0
      %1688 = vdwg.mxu0
      %v1689 = vadd.f32 %v1528, %v1615
      %v1690 = vadd.f32 %v1529, %v1617
      %v1691 = vadd.f32 %v1530, %v1686
      %v1692 = vld [vmem:[%s244] sm:$0xff]
      %1694 = vset.pattern.permute.xlu0 0
      %1695 = vperm.xlu0 %1694, %v1692
      %v1696 = vpop.permute.xlu0 %1695
      %v1698 = vadd.f32 %v1689, %v1696
      %v1699 = vadd.f32 %v1690, %v1696
      %v1700 = vadd.f32 %v1691, %v1696
      %v1702 = vlaneseq
      %v1703 = vshrl.u32 %v1702, 7
      %v1704 = vsub.s32 0, %v1703
      %v1705 = vrot.slane %v254, %v1704
      %v1706 = vlaneseq
      %v1707 = vshrl.u32 %v1706, 7
      %v1708 = vsub.s32 1, %v1707
      %v1709 = vrot.slane %v254, %v1708
      %v1710 = vlaneseq
      %v1711 = vshrl.u32 %v1710, 7
      %v1712 = vsub.s32 2, %v1711
      %v1713 = vrot.slane %v254, %v1712
      %v1717 = vmul.f32 %v1698, %v1705
      %v1718 = vmul.f32 %v1699, %v1709
      %v1719 = vmul.f32 %v1700, %v1713
      %v1720 = vadd.f32 %v1717, %v1718
      %vm1721 = vcmask 261120
      %v1722 = vsel %vm1721, %v1719, 0.0
      %v1723 = vadd.f32 %v1720, %v1722
      %1724 = vadd.xlane.f32.xlu0 %v1723
      %v1725 = vpop.xlane.xlu0 %1724
      %v1726 = vmul.f32 %v1725, 0.00390625
      %v1727 = vsub.f32 %v1698, %v1726
      %v1728 = vsub.f32 %v1699, %v1726
      %v1729 = vsub.f32 %v1700, %v1726
      %v1730 = vmul.f32 %v1727, %v1727
      %v1731 = vmul.f32 %v1728, %v1728
      %v1732 = vmul.f32 %v1729, %v1729
      %v1733 = vmul.f32 %v1730, %v1705
      %v1734 = vmul.f32 %v1731, %v1709
      %v1735 = vmul.f32 %v1732, %v1713
      %v1736 = vadd.f32 %v1733, %v1734
      %v1737 = vsel %vm1721, %v1735, 0.0
      %v1738 = vadd.f32 %v1736, %v1737
      %1739 = vadd.xlane.f32.xlu0 %v1738
      %v1740 = vpop.xlane.xlu0 %1739
      %v1741 = vmul.f32 %v1740, 0.00390625
      %v1742 = vadd.f32 %v1741, 1e-05
      %v1743 = vrsqrt.pop %v1742
      %v1744 = vmul.f32 %v1727, %v1743
      %v1745 = vmul.f32 %v1728, %v1743
      %v1746 = vmul.f32 %v1729, %v1743
      %v1747 = vmax.f32 %v1744, 0.0
      %v1748 = vmax.f32 %v1745, 0.0
      %v1749 = vmax.f32 %v1746, 0.0
      %v1750 = vmul.f32 %v1747, %v1705
      %v1751 = vmul.f32 %v1748, %v1709
      %v1752 = vmul.f32 %v1749, %v1713
      %1753 = vst [vmem:[%s253] sm:$0xff] %v1750
      %1754 = vst [vmem:[%s253 + $0x8] sm:$0xff] %v1751
      %1755 = vst.msk [vmem:[%s253 + $0x10] sm:$0xff] %vm1721, %v1752
      %p1756 = scmp.lt.s32.totalorder %s19, 1
      %s1757 = scalar_select %p1756, %s19, 1
      %p1758 = scmp.lt.s32.totalorder %s20, 0
      %s1759 = scalar_select %p1758, %s20, 0
      %s1760 = smul.addr %s1759, 3
      %s1761 = smul.addr %s1757, 3
      %s1762 = sadd.s32 %s1760, %s1761
      %s1763 = smul.addr %s1762, 8
      %s1764 = scalar_lea.vmem %s4, %s1763
      // Predicated region
      $region37: #{from_rgb_3.1} parent=35 // pred_check
        %p1765 = pneg %p146
      $region38: #{from_rgb_3.1} parent=35 // pred_check_branch
        %1767 = sbr.rel (%p1765) target = $region40
      $region39: #{from_rgb_3.1} parent=35 // pred_region
        _
      $region40: #{from_rgb_3.1} parent=35 // pred_fallthru
        _
    $region36: #{from_rgb_3.1} parent=5 // pred_fallthru
      _
    %p1768 = scmp.le.s32.totalorder 2, %s10
    // Predicated region
    $region41: #{from_rgb_3.1} parent=5 // pred_check
      %p1769 = pneg %p1768
    $region42: #{from_rgb_3.1} parent=5 // pred_check_branch
      %1771 = sbr.rel (%p1769) target = $region44
    $region43: #{from_rgb_3.1} parent=5 // pred_region
      %s1772 = ssub.s32 %s10, 2
      // Predicated region
      $region45: #{from_rgb_3.1} parent=43 // pred_check
        %p1773 = pneg %p152
      $region46: #{from_rgb_3.1} parent=43 // pred_check_branch
        %1775 = sbr.rel (%p1773) target = $region48
      $region47: #{from_rgb_3.1} parent=43 // pred_region
        %p1776 = scmp.lt.s32.totalorder %s21, 1
        %s1777 = scalar_select %p1776, %s21, 1
        %p1778 = scmp.lt.s32.totalorder %s22, 0
        %s1779 = scalar_select %p1778, %s22, 0
        %s1780 = smul.addr %s1779, 3
        %s1781 = smul.addr %s1777, 3
        %s1782 = sadd.s32 %s1780, %s1781
        %s1783 = smul.addr %s1782, 8
        %s1784 = scalar_lea.vmem %s4, %s1783
      $region48: #{from_rgb_3.1} parent=43 // pred_fallthru
        _
    $region44: #{from_rgb_3.1} parent=5 // pred_fallthru
      _
  $region6: #{from_rgb_3.1} parent=0 // loop_footer
    %s14 = sadd.s32 1, %s10
  $region7: #{from_rgb_3.1} parent=0 // loop_footer_branch
    %9 = sbr.rel target = $region3
  $region8: #{from_rgb_3.1} parent=0 // loop_exit
    _

</llo_original>
